<compile_context>
chip_gen: v5e
topology: v5e:2x2
jax: 0.10.0
libtpu: 0.0.40
codegen_flags: <defaults>
</compile_context>

<pallas_src>
import functools

import jax
import jax.numpy as jnp
from jax.experimental import pallas as pl
from jax.experimental.pallas import tpu as pltpu


def _round_up(v, m):
    return (v + m - 1) // m * m


def _vmem_limit_bytes():
    """Per-generation VMEM budget: ~half of physical capacity, capped at 64 MiB."""
    try:
        cap = int(pltpu.get_tpu_info().vmem_capacity_bytes)
    except Exception:
        cap = 64 * 1024 * 1024
    return max(16 * 1024 * 1024, min(cap // 2, 64 * 1024 * 1024))


def _fold_bn(bn, eps=1e-5):
    scale = bn["gamma"] / jnp.sqrt(bn["var"] + eps)
    bias = bn["beta"] - bn["mean"] * scale
    return scale, bias


# ----------------------------------------------------------------------------
# Fused kernel: conv1 + BN + ReLU + maxpool + conv2 + BN + ReLU + avgpool + FC
# ----------------------------------------------------------------------------
def _recog_kernel(x0_ref, x1_ref, x2_ref, mask_ref,
                  w1_ref, s1_ref, b1_ref,
                  w2_ref, s2_ref, b2_ref,
                  fcw_ref, fcb_ref,
                  o_ref,
                  fp_ref, acc_ref,
                  *, Ho, Wo, inv_count):
    """One (sample, frame) step of the whole network.

    x{kt}_ref : [1, 2, R, 21] bf16  parity-split / kw-unfolded input, temporal
                slice t+kt.  Row (r*Wo + wo), plane ph, column 3*kw+ci holds
                xpad[t+kt, 2*r+ph, 2*wo+kw, ci], so the im2col block of every
                (kt, kh) tap group is a CONTIGUOUS row slice.
    Accumulator invariant: grid is (N, T) with T innermost + "arbitrary"; the
    per-sample sum lives in acc_ref across the T iterations of one sample.
    """
    t = pl.program_id(1)
    M = Ho * Wo

    @pl.when(t == 0)
    def _init():
        acc_ref[...] = jnp.zeros_like(acc_ref)

    # ---- conv1: gather the 21 (kt, kh) tap groups as contiguous row slices and
    #      contract them in ONE K=441 MXU matmul (bf16 operands, f32 accum).
    pieces = []
    for x_ref in (x0_ref, x1_ref, x2_ref):            # kt = 0, 1, 2
        for kh in range(7):
            ph, a = kh % 2, kh // 2
            pieces.append(x_ref[0, ph, a * Wo:a * Wo + M, :])
    patch = jnp.concatenate(pieces, axis=-1)           # [M, 441] bf16

    feat = jnp.dot(patch, w1_ref[...], preferred_element_type=jnp.float32)
    feat = jnp.maximum(feat * s1_ref[...] + b1_ref[...], 0.0)   # [M, 64] f32

    # ---- 3x3 / stride-2 / pad-1 max-pool, computed at full resolution on a
    #      zero-padded f32 scratch (ReLU output >= 0, so the 0 border is a safe
    #      pad value).  The 9 window taps are plain contiguous shifted slices.
    fp_ref[...] = jnp.zeros(fp_ref.shape, fp_ref.dtype)
    fp_ref[1:Ho + 1, 1:Wo + 1, :] = feat.reshape(Ho, Wo, -1)
    pooled = fp_ref[0:Ho, 0:Wo, :]
    for i in range(3):
        for j in range(3):
            if i == 0 and j == 0:
                continue
            pooled = jnp.maximum(pooled, fp_ref[i:i + Ho, j:j + Wo, :])

    # ---- 1x1 conv2 + BN + ReLU as one [M, 64] x [64, 128] matmul, then a
    #      masked sum that keeps only the even/even positions (== the true
    #      stride-2 max-pool outputs), accumulated for the global average.
    y = jnp.dot(pooled.reshape(M, -1).astype(w2_ref.dtype), w2_ref[...],
                preferred_element_type=jnp.float32)             # [M, 128] f32
    y = jnp.maximum(y * s2_ref[...] + b2_ref[...], 0.0)
    acc_ref[...] += jnp.sum(y * mask_ref[...], axis=0, keepdims=True)

    # ---- cls head on the last frame: global mean + Linear (Dropout = identity).
    @pl.when(t == pl.num_programs(1) - 1)
    def _finalize():
        mean = acc_ref[...] * inv_count                          # [1, 128]
        logits = jnp.dot(mean, fcw_ref[...],
                         preferred_element_type=jnp.float32) + fcb_ref[...]
        o_ref[...] = logits.reshape(1, 1, -1)


# ----------------------------------------------------------------------------
# Parameters (deterministic synthetic init; shapes match the PyTorch module)
# ----------------------------------------------------------------------------
def init_params(key, num_classes=2, in_channels=128):
    k1, k2, k3 = jax.random.split(key, 3)
    params = {
        # Conv3d(3, 64, k=(3,7,7)), no bias (ConvModule with norm).
        "conv1_w": 0.05 * jax.random.normal(k1, (64, 3, 3, 7, 7), jnp.float32),
        "bn1": dict(gamma=jnp.ones(64), beta=jnp.zeros(64),
                    mean=jnp.zeros(64), var=jnp.ones(64)),
        # Conv3d(64, 128, k=1), no bias.
        "conv2_w": 0.05 * jax.random.normal(k2, (in_channels, 64, 1, 1, 1), jnp.float32),
        "bn2": dict(gamma=jnp.ones(in_channels), beta=jnp.zeros(in_channels),
                    mean=jnp.zeros(in_channels), var=jnp.ones(in_channels)),
        # Linear(128, num_classes)
        "fc_w": 0.01 * jax.random.normal(k3, (num_classes, in_channels), jnp.float32),
        "fc_b": jnp.zeros((num_classes,), jnp.float32),
    }
    return params


# ----------------------------------------------------------------------------
# Forward
# ----------------------------------------------------------------------------
def simple_recog_forward(params, x):
    """x: [N, 3, T, H, W] (NCTHW, like PyTorch) -> cls scores [N, num_classes]."""
    N, Cin, T, H, W = x.shape
    assert Cin == 3

    # conv1 geometry: k=(3,7,7) s=(1,2,2) p=(1,3,3)
    Ho = (H - 1) // 2 + 1
    Wo = (W - 1) // 2 + 1
    # maxpool geometry: k=(1,3,3) s=(1,2,2) p=(0,1,1)
    H2 = (Ho - 1) // 2 + 1
    W2 = (Wo - 1) // 2 + 1
    Hh = Ho + 3                      # rows per H-parity plane of the padded input
    M = Ho * Wo                      # conv1 output pixels per frame
    R = _round_up(Hh * Wo, 8)        # row-padded size of one temporal slice

    # ---- plain-JAX layout glue: pad, stride-2 kw-unfold, H parity split.
    # This is ~4-7x the raw input (vs ~37x for a fully materialized im2col); the
    # rest of the im2col is assembled in VMEM inside the kernel.
    # TODO(synk): the overlapping stride-2 windows of this unfold are not
    # expressible by a BlockSpec index_map; removing it entirely needs in-kernel
    # lane<->sublane relayouts or strided gathers.
    xt = jnp.transpose(x, (0, 2, 3, 4, 1)).astype(jnp.bfloat16)   # NTHWC bf16
    xp = jnp.pad(xt, ((0, 0), (1, 1), (3, 3 + (2 * Hh - (H + 6))), (3, 3), (0, 0)))
    xw = jnp.stack([xp[:, :, :, kw:kw + 2 * Wo:2, :] for kw in range(7)], axis=4)
    #   [N, T+2, 2*Hh, Wo, 7, 3] -> split H rows into (row, parity), fuse (kw, ci)
    xw = xw.reshape(N, T + 2, Hh, 2, Wo, 21)
    xw = xw.transpose(0, 3, 1, 2, 4, 5)                # [N, 2, T+2, Hh, Wo, 21]
    xw = xw.reshape(N, 2, T + 2, Hh * Wo, 21)
    if R != Hh * Wo:
        xw = jnp.pad(xw, ((0, 0), (0, 0), (0, 0), (0, R - Hh * Wo), (0, 0)))
    xw = xw.reshape(N, 2, (T + 2) * R, 21)

    # ---- parameters: BN folded into scale/bias, MXU-friendly shapes.
    Cmid = params["conv1_w"].shape[0]                  # 64 (kept un-padded)
    Cout = params["conv2_w"].shape[0]                  # 128
    num_classes = params["fc_w"].shape[0]
    ncls_pad = 128

    # conv1 weight rows ordered (kt, kh, kw, ci) to match the in-kernel patch.
    w1 = jnp.transpose(params["conv1_w"], (2, 3, 4, 1, 0)).reshape(3 * 7 * 7 * 3, Cmid)
    w1 = w1.astype(jnp.bfloat16)
    s1, b1 = _fold_bn(params["bn1"])
    s1 = s1.reshape(1, Cmid).astype(jnp.float32)
    b1 = b1.reshape(1, Cmid).astype(jnp.float32)

    w2 = params["conv2_w"].reshape(Cout, Cmid).T.astype(jnp.bfloat16)   # [64, 128]
    s2, b2 = _fold_bn(params["bn2"])
    s2 = s2.reshape(1, Cout).astype(jnp.float32)
    b2 = b2.reshape(1, Cout).astype(jnp.float32)

    fcw = jnp.zeros((Cout, ncls_pad), jnp.float32).at[:, :num_classes].set(params["fc_w"].T)
    fcb = jnp.zeros((1, ncls_pad), jnp.float32).at[0, :num_classes].set(params["fc_b"])

    # Even/even full-resolution positions == the true stride-2 max-pool outputs.
    ho_ids = jnp.arange(Ho).reshape(Ho, 1)
    wo_ids = jnp.arange(Wo).reshape(1, Wo)
    mask = ((ho_ids % 2 == 0) & (wo_ids % 2 == 0)).astype(jnp.float32).reshape(M, 1)

    kernel = functools.partial(_recog_kernel, Ho=Ho, Wo=Wo,
                               inv_count=1.0 / float(T * H2 * W2))

    out = pl.pallas_call(
        kernel,
        out_shape=jax.ShapeDtypeStruct((N, 1, ncls_pad), jnp.float32),
        grid=(N, T),
        in_specs=(
            # The same parity-split input viewed at temporal offsets t, t+1, t+2
            # (block size 1 along the flattened temporal axis => element offset).
            [pl.BlockSpec((1, 2, R, 21), lambda n, t, kt=kt: (n, 0, t + kt, 0))
             for kt in range(3)]
            + [
                pl.BlockSpec((M, 1), lambda n, t: (0, 0)),             # mask
                pl.BlockSpec((3 * 7 * 7 * 3, Cmid), lambda n, t: (0, 0)),  # w1
                pl.BlockSpec((1, Cmid), lambda n, t: (0, 0)),          # s1
                pl.BlockSpec((1, Cmid), lambda n, t: (0, 0)),          # b1
                pl.BlockSpec((Cmid, Cout), lambda n, t: (0, 0)),       # w2
                pl.BlockSpec((1, Cout), lambda n, t: (0, 0)),          # s2
                pl.BlockSpec((1, Cout), lambda n, t: (0, 0)),          # b2
                pl.BlockSpec((Cout, ncls_pad), lambda n, t: (0, 0)),   # fc weight
                pl.BlockSpec((1, ncls_pad), lambda n, t: (0, 0)),      # fc bias
            ]
        ),
        out_specs=pl.BlockSpec((1, 1, ncls_pad), lambda n, t: (n, 0, 0)),
        scratch_shapes=[
            pltpu.VMEM((Ho + 2, Wo + 2, Cmid), jnp.float32),   # zero-padded conv1 frame
            pltpu.VMEM((1, Cout), jnp.float32),                # per-sample sum accumulator
        ],
        compiler_params=pltpu.CompilerParams(
            dimension_semantics=("parallel", "arbitrary"),
            vmem_limit_bytes=_vmem_limit_bytes()),
    )(xw, xw, xw, mask, w1, s1, b1, w2, s2, b2, fcw, fcb)

    return out[:, 0, :num_classes]


# ----------------------------------------------------------------------------
if __name__ == "__main__":
    key = jax.random.PRNGKey(0)
    pkey, xkey = jax.random.split(key)
    params = init_params(pkey)

    # Small input consistent with the module: [N=2, C=3, T=4, H=16, W=16]
    x = jax.random.normal(xkey, (2, 3, 4, 16, 16), jnp.float32)

    fwd = jax.jit(functools.partial(simple_recog_forward, params))
    out = jax.block_until_ready(fwd(x))

    assert out.shape == (2, 2), out.shape
    assert bool(jnp.all(jnp.isfinite(out)))
    print("KERNEL_OK")
</pallas_src>

<mosaic_0001>
module attributes {stable_mosaic.version = 11 : i64} {
  func.func @_recog_kernel(%arg0: i32, %arg1: i32, %arg2: memref<1x2x88x21xbf16, #tpu.memory_space<vmem>>, %arg3: memref<1x2x88x21xbf16, #tpu.memory_space<vmem>>, %arg4: memref<1x2x88x21xbf16, #tpu.memory_space<vmem>>, %arg5: memref<64x1xf32, #tpu.memory_space<vmem>>, %arg6: memref<441x64xbf16, #tpu.memory_space<vmem>>, %arg7: memref<1x64xf32, #tpu.memory_space<vmem>>, %arg8: memref<1x64xf32, #tpu.memory_space<vmem>>, %arg9: memref<64x128xbf16, #tpu.memory_space<vmem>>, %arg10: memref<1x128xf32, #tpu.memory_space<vmem>>, %arg11: memref<1x128xf32, #tpu.memory_space<vmem>>, %arg12: memref<128x128xf32, #tpu.memory_space<vmem>>, %arg13: memref<1x128xf32, #tpu.memory_space<vmem>>, %arg14: memref<1x1x128xf32, #tpu.memory_space<vmem>>, %arg15: memref<10x10x64xf32, #tpu.memory_space<vmem>>, %arg16: memref<1x128xf32, #tpu.memory_space<vmem>>) attributes {dimension_semantics = [#tpu.dimension_semantics<parallel>, #tpu.dimension_semantics<arbitrary>], iteration_bounds = array<i64: 2, 4>, scalar_prefetch = 0 : i64, scratch_operands = 2 : i64, tpu.core_type = #tpu.core_type<tc>, window_params = [{transform_indices = @transform_0, window_bounds = array<i64: 1, 2, 88, 21>}, {transform_indices = @transform_1, window_bounds = array<i64: 1, 2, 88, 21>}, {transform_indices = @transform_2, window_bounds = array<i64: 1, 2, 88, 21>}, {pipeline_mode = #tpu.pipeline_mode<synchronous>, transform_indices = @transform_3, window_bounds = array<i64: 64, 1>}, {pipeline_mode = #tpu.pipeline_mode<synchronous>, transform_indices = @transform_4, window_bounds = array<i64: 441, 64>}, {pipeline_mode = #tpu.pipeline_mode<synchronous>, transform_indices = @transform_5, window_bounds = array<i64: 1, 64>}, {pipeline_mode = #tpu.pipeline_mode<synchronous>, transform_indices = @transform_6, window_bounds = array<i64: 1, 64>}, {pipeline_mode = #tpu.pipeline_mode<synchronous>, transform_indices = @transform_7, window_bounds = array<i64: 64, 128>}, {pipeline_mode = #tpu.pipeline_mode<synchronous>, transform_indices = @transform_8, window_bounds = array<i64: 1, 128>}, {pipeline_mode = #tpu.pipeline_mode<synchronous>, transform_indices = @transform_9, window_bounds = array<i64: 1, 128>}, {pipeline_mode = #tpu.pipeline_mode<synchronous>, transform_indices = @transform_10, window_bounds = array<i64: 128, 128>}, {pipeline_mode = #tpu.pipeline_mode<synchronous>, transform_indices = @transform_11, window_bounds = array<i64: 1, 128>}, {transform_indices = @transform_12, window_bounds = array<i64: 1, 1, 128>}]} {
    %c0_i32 = arith.constant 0 : i32
    %0 = arith.cmpi eq, %arg1, %c0_i32 : i32
    %1 = arith.extui %0 : i1 to i32
    %c0_i32_0 = arith.constant 0 : i32
    %2 = arith.cmpi ne, %1, %c0_i32_0 : i32
    scf.if %2 {
      %cst_136 = arith.constant 0.000000e+00 : f32
      %102 = vector.broadcast %cst_136 : f32 to vector<1x128xf32>
      %c0_137 = arith.constant 0 : index
      %c0_138 = arith.constant 0 : index
      %103 = vector.load %arg16[%c0_137, %c0_138] : memref<1x128xf32, #tpu.memory_space<vmem>>, vector<1x128xf32>
      tpu.vector_store %arg16[%c0_137, %c0_138], %102 {strides = array<i32>} : memref<1x128xf32, #tpu.memory_space<vmem>>, vector<1x128xf32>,
    } else {
    }
    %c0 = arith.constant 0 : index
    %c0_1 = arith.constant 0 : index
    %c0_2 = arith.constant 0 : index
    %c0_3 = arith.constant 0 : index
    %3 = vector.load %arg2[%c0, %c0_1, %c0_2, %c0_3] : memref<1x2x88x21xbf16, #tpu.memory_space<vmem>>, vector<1x1x64x21xbf16>
    %4 = vector.shape_cast %3 : vector<1x1x64x21xbf16> to vector<64x21xbf16>
    %c0_4 = arith.constant 0 : index
    %c1 = arith.constant 1 : index
    %c0_5 = arith.constant 0 : index
    %c0_6 = arith.constant 0 : index
    %5 = vector.load %arg2[%c0_4, %c1, %c0_5, %c0_6] : memref<1x2x88x21xbf16, #tpu.memory_space<vmem>>, vector<1x1x64x21xbf16>
    %6 = vector.shape_cast %5 : vector<1x1x64x21xbf16> to vector<64x21xbf16>
    %c0_7 = arith.constant 0 : index
    %c0_8 = arith.constant 0 : index
    %c8 = arith.constant 8 : index
    %c0_9 = arith.constant 0 : index
    %7 = vector.load %arg2[%c0_7, %c0_8, %c8, %c0_9] : memref<1x2x88x21xbf16, #tpu.memory_space<vmem>>, vector<1x1x64x21xbf16>
    %8 = vector.shape_cast %7 : vector<1x1x64x21xbf16> to vector<64x21xbf16>
    %c0_10 = arith.constant 0 : index
    %c1_11 = arith.constant 1 : index
    %c8_12 = arith.constant 8 : index
    %c0_13 = arith.constant 0 : index
    %9 = vector.load %arg2[%c0_10, %c1_11, %c8_12, %c0_13] : memref<1x2x88x21xbf16, #tpu.memory_space<vmem>>, vector<1x1x64x21xbf16>
    %10 = vector.shape_cast %9 : vector<1x1x64x21xbf16> to vector<64x21xbf16>
    %c0_14 = arith.constant 0 : index
    %c0_15 = arith.constant 0 : index
    %c16 = arith.constant 16 : index
    %c0_16 = arith.constant 0 : index
    %11 = vector.load %arg2[%c0_14, %c0_15, %c16, %c0_16] : memref<1x2x88x21xbf16, #tpu.memory_space<vmem>>, vector<1x1x64x21xbf16>
    %12 = vector.shape_cast %11 : vector<1x1x64x21xbf16> to vector<64x21xbf16>
    %c0_17 = arith.constant 0 : index
    %c1_18 = arith.constant 1 : index
    %c16_19 = arith.constant 16 : index
    %c0_20 = arith.constant 0 : index
    %13 = vector.load %arg2[%c0_17, %c1_18, %c16_19, %c0_20] : memref<1x2x88x21xbf16, #tpu.memory_space<vmem>>, vector<1x1x64x21xbf16>
    %14 = vector.shape_cast %13 : vector<1x1x64x21xbf16> to vector<64x21xbf16>
    %c0_21 = arith.constant 0 : index
    %c0_22 = arith.constant 0 : index
    %c24 = arith.constant 24 : index
    %c0_23 = arith.constant 0 : index
    %15 = vector.load %arg2[%c0_21, %c0_22, %c24, %c0_23] : memref<1x2x88x21xbf16, #tpu.memory_space<vmem>>, vector<1x1x64x21xbf16>
    %16 = vector.shape_cast %15 : vector<1x1x64x21xbf16> to vector<64x21xbf16>
    %c0_24 = arith.constant 0 : index
    %c0_25 = arith.constant 0 : index
    %c0_26 = arith.constant 0 : index
    %c0_27 = arith.constant 0 : index
    %17 = vector.load %arg3[%c0_24, %c0_25, %c0_26, %c0_27] : memref<1x2x88x21xbf16, #tpu.memory_space<vmem>>, vector<1x1x64x21xbf16>
    %18 = vector.shape_cast %17 : vector<1x1x64x21xbf16> to vector<64x21xbf16>
    %c0_28 = arith.constant 0 : index
    %c1_29 = arith.constant 1 : index
    %c0_30 = arith.constant 0 : index
    %c0_31 = arith.constant 0 : index
    %19 = vector.load %arg3[%c0_28, %c1_29, %c0_30, %c0_31] : memref<1x2x88x21xbf16, #tpu.memory_space<vmem>>, vector<1x1x64x21xbf16>
    %20 = vector.shape_cast %19 : vector<1x1x64x21xbf16> to vector<64x21xbf16>
    %c0_32 = arith.constant 0 : index
    %c0_33 = arith.constant 0 : index
    %c8_34 = arith.constant 8 : index
    %c0_35 = arith.constant 0 : index
    %21 = vector.load %arg3[%c0_32, %c0_33, %c8_34, %c0_35] : memref<1x2x88x21xbf16, #tpu.memory_space<vmem>>, vector<1x1x64x21xbf16>
    %22 = vector.shape_cast %21 : vector<1x1x64x21xbf16> to vector<64x21xbf16>
    %c0_36 = arith.constant 0 : index
    %c1_37 = arith.constant 1 : index
    %c8_38 = arith.constant 8 : index
    %c0_39 = arith.constant 0 : index
    %23 = vector.load %arg3[%c0_36, %c1_37, %c8_38, %c0_39] : memref<1x2x88x21xbf16, #tpu.memory_space<vmem>>, vector<1x1x64x21xbf16>
    %24 = vector.shape_cast %23 : vector<1x1x64x21xbf16> to vector<64x21xbf16>
    %c0_40 = arith.constant 0 : index
    %c0_41 = arith.constant 0 : index
    %c16_42 = arith.constant 16 : index
    %c0_43 = arith.constant 0 : index
    %25 = vector.load %arg3[%c0_40, %c0_41, %c16_42, %c0_43] : memref<1x2x88x21xbf16, #tpu.memory_space<vmem>>, vector<1x1x64x21xbf16>
    %26 = vector.shape_cast %25 : vector<1x1x64x21xbf16> to vector<64x21xbf16>
    %c0_44 = arith.constant 0 : index
    %c1_45 = arith.constant 1 : index
    %c16_46 = arith.constant 16 : index
    %c0_47 = arith.constant 0 : index
    %27 = vector.load %arg3[%c0_44, %c1_45, %c16_46, %c0_47] : memref<1x2x88x21xbf16, #tpu.memory_space<vmem>>, vector<1x1x64x21xbf16>
    %28 = vector.shape_cast %27 : vector<1x1x64x21xbf16> to vector<64x21xbf16>
    %c0_48 = arith.constant 0 : index
    %c0_49 = arith.constant 0 : index
    %c24_50 = arith.constant 24 : index
    %c0_51 = arith.constant 0 : index
    %29 = vector.load %arg3[%c0_48, %c0_49, %c24_50, %c0_51] : memref<1x2x88x21xbf16, #tpu.memory_space<vmem>>, vector<1x1x64x21xbf16>
    %30 = vector.shape_cast %29 : vector<1x1x64x21xbf16> to vector<64x21xbf16>
    %c0_52 = arith.constant 0 : index
    %c0_53 = arith.constant 0 : index
    %c0_54 = arith.constant 0 : index
    %c0_55 = arith.constant 0 : index
    %31 = vector.load %arg4[%c0_52, %c0_53, %c0_54, %c0_55] : memref<1x2x88x21xbf16, #tpu.memory_space<vmem>>, vector<1x1x64x21xbf16>
    %32 = vector.shape_cast %31 : vector<1x1x64x21xbf16> to vector<64x21xbf16>
    %c0_56 = arith.constant 0 : index
    %c1_57 = arith.constant 1 : index
    %c0_58 = arith.constant 0 : index
    %c0_59 = arith.constant 0 : index
    %33 = vector.load %arg4[%c0_56, %c1_57, %c0_58, %c0_59] : memref<1x2x88x21xbf16, #tpu.memory_space<vmem>>, vector<1x1x64x21xbf16>
    %34 = vector.shape_cast %33 : vector<1x1x64x21xbf16> to vector<64x21xbf16>
    %c0_60 = arith.constant 0 : index
    %c0_61 = arith.constant 0 : index
    %c8_62 = arith.constant 8 : index
    %c0_63 = arith.constant 0 : index
    %35 = vector.load %arg4[%c0_60, %c0_61, %c8_62, %c0_63] : memref<1x2x88x21xbf16, #tpu.memory_space<vmem>>, vector<1x1x64x21xbf16>
    %36 = vector.shape_cast %35 : vector<1x1x64x21xbf16> to vector<64x21xbf16>
    %c0_64 = arith.constant 0 : index
    %c1_65 = arith.constant 1 : index
    %c8_66 = arith.constant 8 : index
    %c0_67 = arith.constant 0 : index
    %37 = vector.load %arg4[%c0_64, %c1_65, %c8_66, %c0_67] : memref<1x2x88x21xbf16, #tpu.memory_space<vmem>>, vector<1x1x64x21xbf16>
    %38 = vector.shape_cast %37 : vector<1x1x64x21xbf16> to vector<64x21xbf16>
    %c0_68 = arith.constant 0 : index
    %c0_69 = arith.constant 0 : index
    %c16_70 = arith.constant 16 : index
    %c0_71 = arith.constant 0 : index
    %39 = vector.load %arg4[%c0_68, %c0_69, %c16_70, %c0_71] : memref<1x2x88x21xbf16, #tpu.memory_space<vmem>>, vector<1x1x64x21xbf16>
    %40 = vector.shape_cast %39 : vector<1x1x64x21xbf16> to vector<64x21xbf16>
    %c0_72 = arith.constant 0 : index
    %c1_73 = arith.constant 1 : index
    %c16_74 = arith.constant 16 : index
    %c0_75 = arith.constant 0 : index
    %41 = vector.load %arg4[%c0_72, %c1_73, %c16_74, %c0_75] : memref<1x2x88x21xbf16, #tpu.memory_space<vmem>>, vector<1x1x64x21xbf16>
    %42 = vector.shape_cast %41 : vector<1x1x64x21xbf16> to vector<64x21xbf16>
    %c0_76 = arith.constant 0 : index
    %c0_77 = arith.constant 0 : index
    %c24_78 = arith.constant 24 : index
    %c0_79 = arith.constant 0 : index
    %43 = vector.load %arg4[%c0_76, %c0_77, %c24_78, %c0_79] : memref<1x2x88x21xbf16, #tpu.memory_space<vmem>>, vector<1x1x64x21xbf16>
    %44 = vector.shape_cast %43 : vector<1x1x64x21xbf16> to vector<64x21xbf16>
    %45 = tpu.concatenate %4, %6, %8, %10, %12, %14, %16, %18, %20, %22, %24, %26, %28, %30, %32, %34 in 1 : vector<64x21xbf16>, vector<64x21xbf16>, vector<64x21xbf16>, vector<64x21xbf16>, vector<64x21xbf16>, vector<64x21xbf16>, vector<64x21xbf16>, vector<64x21xbf16>, vector<64x21xbf16>, vector<64x21xbf16>, vector<64x21xbf16>, vector<64x21xbf16>, vector<64x21xbf16>, vector<64x21xbf16>, vector<64x21xbf16>, vector<64x21xbf16> -> vector<64x336xbf16>
    %46 = tpu.concatenate %36, %38, %40, %42, %44 in 1 : vector<64x21xbf16>, vector<64x21xbf16>, vector<64x21xbf16>, vector<64x21xbf16>, vector<64x21xbf16> -> vector<64x105xbf16>
    %47 = tpu.concatenate %45, %46 in 1 : vector<64x336xbf16>, vector<64x105xbf16> -> vector<64x441xbf16>
    %c0_80 = arith.constant 0 : index
    %c0_81 = arith.constant 0 : index
    %48 = vector.load %arg6[%c0_80, %c0_81] : memref<441x64xbf16, #tpu.memory_space<vmem>>, vector<441x64xbf16>
    %cst = arith.constant dense<0.000000e+00> : vector<64x64xf32>
    %49 = tpu.matmul %47, %48, %cst {dimension_numbers = #tpu.dot_dimension_numbers<[1], [0], [0], [1], [0, 0, 1, 1], [], []>} : vector<64x441xbf16>, vector<441x64xbf16>, vector<64x64xf32> -> vector<64x64xf32>
    %c0_82 = arith.constant 0 : index
    %c0_83 = arith.constant 0 : index
    %50 = vector.load %arg7[%c0_82, %c0_83] : memref<1x64xf32, #tpu.memory_space<vmem>>, vector<1x64xf32>
    %51 = vector.broadcast %50 : vector<1x64xf32> to vector<64x64xf32>
    %52 = arith.mulf %49, %51 : vector<64x64xf32>
    %c0_84 = arith.constant 0 : index
    %c0_85 = arith.constant 0 : index
    %53 = vector.load %arg8[%c0_84, %c0_85] : memref<1x64xf32, #tpu.memory_space<vmem>>, vector<1x64xf32>
    %54 = vector.broadcast %53 : vector<1x64xf32> to vector<64x64xf32>
    %55 = arith.addf %52, %54 : vector<64x64xf32>
    %cst_86 = arith.constant 0.000000e+00 : f32
    %56 = vector.broadcast %cst_86 : f32 to vector<64x64xf32>
    %57 = arith.maximumf %55, %56 : vector<64x64xf32>
    %cst_87 = arith.constant 0.000000e+00 : f32
    %58 = vector.broadcast %cst_87 : f32 to vector<10x10x64xf32>
    %c0_88 = arith.constant 0 : index
    %c0_89 = arith.constant 0 : index
    %c0_90 = arith.constant 0 : index
    %59 = vector.load %arg15[%c0_88, %c0_89, %c0_90] : memref<10x10x64xf32, #tpu.memory_space<vmem>>, vector<10x10x64xf32>
    tpu.vector_store %arg15[%c0_88, %c0_89, %c0_90], %58 {strides = array<i32>} : memref<10x10x64xf32, #tpu.memory_space<vmem>>, vector<10x10x64xf32>,
    %60 = vector.shape_cast %57 : vector<64x64xf32> to vector<8x8x64xf32>
    %c1_91 = arith.constant 1 : index
    %c1_92 = arith.constant 1 : index
    %c0_93 = arith.constant 0 : index
    %61 = vector.load %arg15[%c1_91, %c1_92, %c0_93] : memref<10x10x64xf32, #tpu.memory_space<vmem>>, vector<8x8x64xf32>
    tpu.vector_store %arg15[%c1_91, %c1_92, %c0_93], %60 {strides = array<i32>} : memref<10x10x64xf32, #tpu.memory_space<vmem>>, vector<8x8x64xf32>,
    %c0_94 = arith.constant 0 : index
    %c0_95 = arith.constant 0 : index
    %c0_96 = arith.constant 0 : index
    %62 = vector.load %arg15[%c0_94, %c0_95, %c0_96] : memref<10x10x64xf32, #tpu.memory_space<vmem>>, vector<8x8x64xf32>
    %c0_97 = arith.constant 0 : index
    %c1_98 = arith.constant 1 : index
    %c0_99 = arith.constant 0 : index
    %63 = vector.load %arg15[%c0_97, %c1_98, %c0_99] : memref<10x10x64xf32, #tpu.memory_space<vmem>>, vector<8x8x64xf32>
    %64 = arith.maximumf %62, %63 : vector<8x8x64xf32>
    %c0_100 = arith.constant 0 : index
    %c2 = arith.constant 2 : index
    %c0_101 = arith.constant 0 : index
    %65 = vector.load %arg15[%c0_100, %c2, %c0_101] : memref<10x10x64xf32, #tpu.memory_space<vmem>>, vector<8x8x64xf32>
    %66 = arith.maximumf %64, %65 : vector<8x8x64xf32>
    %c1_102 = arith.constant 1 : index
    %c0_103 = arith.constant 0 : index
    %c0_104 = arith.constant 0 : index
    %67 = vector.load %arg15[%c1_102, %c0_103, %c0_104] : memref<10x10x64xf32, #tpu.memory_space<vmem>>, vector<8x8x64xf32>
    %68 = arith.maximumf %66, %67 : vector<8x8x64xf32>
    %c1_105 = arith.constant 1 : index
    %c1_106 = arith.constant 1 : index
    %c0_107 = arith.constant 0 : index
    %69 = vector.load %arg15[%c1_105, %c1_106, %c0_107] : memref<10x10x64xf32, #tpu.memory_space<vmem>>, vector<8x8x64xf32>
    %70 = arith.maximumf %68, %69 : vector<8x8x64xf32>
    %c1_108 = arith.constant 1 : index
    %c2_109 = arith.constant 2 : index
    %c0_110 = arith.constant 0 : index
    %71 = vector.load %arg15[%c1_108, %c2_109, %c0_110] : memref<10x10x64xf32, #tpu.memory_space<vmem>>, vector<8x8x64xf32>
    %72 = arith.maximumf %70, %71 : vector<8x8x64xf32>
    %c2_111 = arith.constant 2 : index
    %c0_112 = arith.constant 0 : index
    %c0_113 = arith.constant 0 : index
    %73 = vector.load %arg15[%c2_111, %c0_112, %c0_113] : memref<10x10x64xf32, #tpu.memory_space<vmem>>, vector<8x8x64xf32>
    %74 = arith.maximumf %72, %73 : vector<8x8x64xf32>
    %c2_114 = arith.constant 2 : index
    %c1_115 = arith.constant 1 : index
    %c0_116 = arith.constant 0 : index
    %75 = vector.load %arg15[%c2_114, %c1_115, %c0_116] : memref<10x10x64xf32, #tpu.memory_space<vmem>>, vector<8x8x64xf32>
    %76 = arith.maximumf %74, %75 : vector<8x8x64xf32>
    %c2_117 = arith.constant 2 : index
    %c2_118 = arith.constant 2 : index
    %c0_119 = arith.constant 0 : index
    %77 = vector.load %arg15[%c2_117, %c2_118, %c0_119] : memref<10x10x64xf32, #tpu.memory_space<vmem>>, vector<8x8x64xf32>
    %78 = arith.maximumf %76, %77 : vector<8x8x64xf32>
    %79 = vector.shape_cast %78 : vector<8x8x64xf32> to vector<64x64xf32>
    %80 = arith.truncf %79 : vector<64x64xf32> to vector<64x64xbf16>
    %c0_120 = arith.constant 0 : index
    %c0_121 = arith.constant 0 : index
    %81 = vector.load %arg9[%c0_120, %c0_121] : memref<64x128xbf16, #tpu.memory_space<vmem>>, vector<64x128xbf16>
    %cst_122 = arith.constant dense<0.000000e+00> : vector<64x128xf32>
    %82 = tpu.matmul %80, %81, %cst_122 {dimension_numbers = #tpu.dot_dimension_numbers<[1], [0], [0], [1], [0, 0, 1, 1], [], []>} : vector<64x64xbf16>, vector<64x128xbf16>, vector<64x128xf32> -> vector<64x128xf32>
    %c0_123 = arith.constant 0 : index
    %c0_124 = arith.constant 0 : index
    %83 = vector.load %arg10[%c0_123, %c0_124] : memref<1x128xf32, #tpu.memory_space<vmem>>, vector<1x128xf32>
    %84 = vector.broadcast %83 : vector<1x128xf32> to vector<64x128xf32>
    %85 = arith.mulf %82, %84 : vector<64x128xf32>
    %c0_125 = arith.constant 0 : index
    %c0_126 = arith.constant 0 : index
    %86 = vector.load %arg11[%c0_125, %c0_126] : memref<1x128xf32, #tpu.memory_space<vmem>>, vector<1x128xf32>
    %87 = vector.broadcast %86 : vector<1x128xf32> to vector<64x128xf32>
    %88 = arith.addf %85, %87 : vector<64x128xf32>
    %cst_127 = arith.constant 0.000000e+00 : f32
    %89 = vector.broadcast %cst_127 : f32 to vector<64x128xf32>
    %90 = arith.maximumf %88, %89 : vector<64x128xf32>
    %c0_128 = arith.constant 0 : index
    %c0_129 = arith.constant 0 : index
    %91 = vector.load %arg16[%c0_128, %c0_129] : memref<1x128xf32, #tpu.memory_space<vmem>>, vector<1x128xf32>
    %c0_130 = arith.constant 0 : index
    %c0_131 = arith.constant 0 : index
    %92 = vector.load %arg5[%c0_130, %c0_131] : memref<64x1xf32, #tpu.memory_space<vmem>>, vector<64x1xf32>
    %93 = vector.broadcast %92 : vector<64x1xf32> to vector<64x128xf32>
    %94 = arith.mulf %90, %93 : vector<64x128xf32>
    %cst_132 = arith.constant dense<0.000000e+00> : vector<128xf32>
    %95 = vector.multi_reduction <add>, %94, %cst_132 [0] : vector<64x128xf32> to vector<128xf32>
    %96 = vector.shape_cast %95 : vector<128xf32> to vector<1x128xf32>
    %97 = arith.addf %91, %96 : vector<1x128xf32>
    %c0_133 = arith.constant 0 : index
    %c0_134 = arith.constant 0 : index
    %98 = vector.load %arg16[%c0_133, %c0_134] : memref<1x128xf32, #tpu.memory_space<vmem>>, vector<1x128xf32>
    tpu.vector_store %arg16[%c0_133, %c0_134], %97 {strides = array<i32>} : memref<1x128xf32, #tpu.memory_space<vmem>>, vector<1x128xf32>,
    %c3_i32 = arith.constant 3 : i32
    %99 = arith.cmpi eq, %arg1, %c3_i32 : i32
    %100 = arith.extui %99 : i1 to i32
    %c0_i32_135 = arith.constant 0 : i32
    %101 = arith.cmpi ne, %100, %c0_i32_135 : i32
    scf.if %101 {
      %c0_136 = arith.constant 0 : index
      %c0_137 = arith.constant 0 : index
      %102 = vector.load %arg16[%c0_136, %c0_137] : memref<1x128xf32, #tpu.memory_space<vmem>>, vector<1x128xf32>
      %cst_138 = arith.constant 1.562500e-02 : f32
      %103 = vector.broadcast %cst_138 : f32 to vector<1x128xf32>
      %104 = arith.mulf %102, %103 : vector<1x128xf32>
      %c0_139 = arith.constant 0 : index
      %c0_140 = arith.constant 0 : index
      %105 = vector.load %arg12[%c0_139, %c0_140] : memref<128x128xf32, #tpu.memory_space<vmem>>, vector<128x128xf32>
      %cst_141 = arith.constant dense<0.000000e+00> : vector<1x128xf32>
      %106 = tpu.matmul %104, %105, %cst_141 {dimension_numbers = #tpu.dot_dimension_numbers<[1], [0], [0], [1], [0, 0, 1, 1], [], []>} : vector<1x128xf32>, vector<128x128xf32>, vector<1x128xf32> -> vector<1x128xf32>
      %c0_142 = arith.constant 0 : index
      %c0_143 = arith.constant 0 : index
      %107 = vector.load %arg13[%c0_142, %c0_143] : memref<1x128xf32, #tpu.memory_space<vmem>>, vector<1x128xf32>
      %108 = arith.addf %106, %107 : vector<1x128xf32>
      %109 = vector.shape_cast %108 : vector<1x128xf32> to vector<1x1x128xf32>
      %c0_144 = arith.constant 0 : index
      %c0_145 = arith.constant 0 : index
      %c0_146 = arith.constant 0 : index
      %110 = vector.load %arg14[%c0_144, %c0_145, %c0_146] : memref<1x1x128xf32, #tpu.memory_space<vmem>>, vector<1x1x128xf32>
      tpu.vector_store %arg14[%c0_144, %c0_145, %c0_146], %109 {strides = array<i32>} : memref<1x1x128xf32, #tpu.memory_space<vmem>>, vector<1x1x128xf32>,
    } else {
    }
    return
  }
  func.func @transform_0(%arg0: i32, %arg1: i32) -> (i32, i32, i32, i32) {
    %c0_i32 = arith.constant 0 : i32
    %0 = arith.addi %arg1, %c0_i32 : i32
    %c0_i32_0 = arith.constant 0 : i32
    %c0_i32_1 = arith.constant 0 : i32
    %c0_i32_2 = arith.constant 0 : i32
    return %arg0, %c0_i32_0, %0, %c0_i32_1 : i32, i32, i32, i32
  }
  func.func @transform_1(%arg0: i32, %arg1: i32) -> (i32, i32, i32, i32) {
    %c1_i32 = arith.constant 1 : i32
    %0 = arith.addi %arg1, %c1_i32 : i32
    %c0_i32 = arith.constant 0 : i32
    %c0_i32_0 = arith.constant 0 : i32
    %c0_i32_1 = arith.constant 0 : i32
    return %arg0, %c0_i32, %0, %c0_i32_0 : i32, i32, i32, i32
  }
  func.func @transform_2(%arg0: i32, %arg1: i32) -> (i32, i32, i32, i32) {
    %c2_i32 = arith.constant 2 : i32
    %0 = arith.addi %arg1, %c2_i32 : i32
    %c0_i32 = arith.constant 0 : i32
    %c0_i32_0 = arith.constant 0 : i32
    %c0_i32_1 = arith.constant 0 : i32
    return %arg0, %c0_i32, %0, %c0_i32_0 : i32, i32, i32, i32
  }
  func.func @transform_3(%arg0: i32, %arg1: i32) -> (i32, i32) {
    %c0_i32 = arith.constant 0 : i32
    %c0_i32_0 = arith.constant 0 : i32
    %c0_i32_1 = arith.constant 0 : i32
    return %c0_i32, %c0_i32_0 : i32, i32
  }
  func.func @transform_4(%arg0: i32, %arg1: i32) -> (i32, i32) {
    %c0_i32 = arith.constant 0 : i32
    %c0_i32_0 = arith.constant 0 : i32
    %c0_i32_1 = arith.constant 0 : i32
    return %c0_i32, %c0_i32_0 : i32, i32
  }
  func.func @transform_5(%arg0: i32, %arg1: i32) -> (i32, i32) {
    %c0_i32 = arith.constant 0 : i32
    %c0_i32_0 = arith.constant 0 : i32
    %c0_i32_1 = arith.constant 0 : i32
    return %c0_i32, %c0_i32_0 : i32, i32
  }
  func.func @transform_6(%arg0: i32, %arg1: i32) -> (i32, i32) {
    %c0_i32 = arith.constant 0 : i32
    %c0_i32_0 = arith.constant 0 : i32
    %c0_i32_1 = arith.constant 0 : i32
    return %c0_i32, %c0_i32_0 : i32, i32
  }
  func.func @transform_7(%arg0: i32, %arg1: i32) -> (i32, i32) {
    %c0_i32 = arith.constant 0 : i32
    %c0_i32_0 = arith.constant 0 : i32
    %c0_i32_1 = arith.constant 0 : i32
    return %c0_i32, %c0_i32_0 : i32, i32
  }
  func.func @transform_8(%arg0: i32, %arg1: i32) -> (i32, i32) {
    %c0_i32 = arith.constant 0 : i32
    %c0_i32_0 = arith.constant 0 : i32
    %c0_i32_1 = arith.constant 0 : i32
    return %c0_i32, %c0_i32_0 : i32, i32
  }
  func.func @transform_9(%arg0: i32, %arg1: i32) -> (i32, i32) {
    %c0_i32 = arith.constant 0 : i32
    %c0_i32_0 = arith.constant 0 : i32
    %c0_i32_1 = arith.constant 0 : i32
    return %c0_i32, %c0_i32_0 : i32, i32
  }
  func.func @transform_10(%arg0: i32, %arg1: i32) -> (i32, i32) {
    %c0_i32 = arith.constant 0 : i32
    %c0_i32_0 = arith.constant 0 : i32
    %c0_i32_1 = arith.constant 0 : i32
    return %c0_i32, %c0_i32_0 : i32, i32
  }
  func.func @transform_11(%arg0: i32, %arg1: i32) -> (i32, i32) {
    %c0_i32 = arith.constant 0 : i32
    %c0_i32_0 = arith.constant 0 : i32
    %c0_i32_1 = arith.constant 0 : i32
    return %c0_i32, %c0_i32_0 : i32, i32
  }
  func.func @transform_12(%arg0: i32, %arg1: i32) -> (i32, i32, i32) {
    %c0_i32 = arith.constant 0 : i32
    %c0_i32_0 = arith.constant 0 : i32
    %c0_i32_1 = arith.constant 0 : i32
    return %arg0, %c0_i32, %c0_i32_0 : i32, i32, i32
  }
}

</mosaic_0001>

<llo_original>
// kernel: simple_recog_forward.1
$region0: #{simple_recog_forward.1}
  #allocation0 [shape = 'u32[]', space=smem, size = 0x4, offset = 0x4, fixed_abs, tag = 'smem constant byte address 0x4 - core index']
  #allocation1 [shape = 'u32[72,128]{1,0:T(1,128)}', space=vmem, size = 0x9000, scoped, tag = 'internal scratch']
  #allocation2 [shape = 'f32[10,10,64]{2,1,0:T(8,128)}', space=vmem, size = 0x14000, scoped, tag = 'scratch operand']
  #allocation3 [shape = 'f32[1,128]{1,0:T(1,128)}', space=vmem, size = 0x200, scoped, tag = 'scratch operand']
  %s0 = inlined_call_operand.vmem [shape: bf16[2,2,528,21], index: 0, kind: input, shape index: {}, may-alias: {0,1,2}]
  %s1 = inlined_call_operand.vmem [shape: bf16[2,2,528,21], index: 1, kind: input, shape index: {}, may-alias: {0,1,2}]
  %s2 = inlined_call_operand.vmem [shape: bf16[2,2,528,21], index: 2, kind: input, shape index: {}, may-alias: {0,1,2}]
  %s3 = inlined_call_operand.vmem [shape: f32[64,1], index: 3, kind: input, shape index: {}]
  %s4 = inlined_call_operand.vmem [shape: bf16[441,64], index: 4, kind: input, shape index: {}]
  %s5 = inlined_call_operand.vmem [shape: f32[1,64], index: 5, kind: input, shape index: {}]
  %s6 = inlined_call_operand.vmem [shape: f32[1,64], index: 6, kind: input, shape index: {}]
  %s7 = inlined_call_operand.vmem [shape: bf16[64,128], index: 7, kind: input, shape index: {}]
  %s8 = inlined_call_operand.vmem [shape: f32[1,128], index: 8, kind: input, shape index: {}]
  %s9 = inlined_call_operand.vmem [shape: f32[1,128], index: 9, kind: input, shape index: {}]
  %s10 = inlined_call_operand.vmem [shape: f32[128,128], index: 10, kind: input, shape index: {}]
  %s11 = inlined_call_operand.vmem [shape: f32[1,128], index: 11, kind: input, shape index: {}]
  %s12 = inlined_call_operand.hbm [shape: f32[2,1,128], index: 12, kind: output, shape index: {}]
  %s13 = sld [smem:[#allocation0]]
  $region212: #{simple_recog_forward.1} parent=0
    _
  %s15 = ssub.s32 1, %s13
  %s16 = scalar_select 0, %s15, %s13
  $region1: #{simple_recog_forward.1} parent=0
    #allocation4 [shape = 'u8[90112]{0}', space=vmem, size = 0x16000, scoped, tag = 'input window, operand 0']
    #allocation5 [shape = 'u8[90112]{0}', space=vmem, size = 0x16000, scoped, tag = 'input window, operand 1']
    #allocation6 [shape = 'u8[90112]{0}', space=vmem, size = 0x16000, scoped, tag = 'input window, operand 2']
    #allocation7 [shape = 'u8[1024]{0}', space=vmem, size = 0x400, scoped, tag = 'output window, operand 0']
    #allocation8 [shape = 's32[2]{0}', space=sflag, size = 0x8, scoped, tag = 'scoped memory for simple_recog_forward.1']
    %17 = vsyncpa [#allocation8], 0
    %s18 = scalar_lea.sflag [#allocation8], 1
    %19 = vsyncpa %s18, 0
    loop: start=0, step=1, limit=10
    $region2: #{simple_recog_forward.1} parent=1 // loop_pre_header
      _
    $region3: #{simple_recog_forward.1} parent=1 // loop_header
      %s21 = sphi 0, %s25
      %p22 = scmp.ge.s32.totalorder %s21, 10
      %s28 = sphi 0, %s40
      %s29 = sphi 0, %s36
      %s30 = sphi 0, %s28
      %s31 = sphi 0, %s29
      %s32 = sphi 0, %s30
      %s33 = sphi 0, %s31
      %s45 = sphi 0, %s47
      %s48 = sphi 0, %s45
      %s49 = sphi 0, %s48
      %s65 = sphi 0, %s49
      %s75 = sphi 0, %s77
      %s78 = sphi 0, %s75
      %s79 = sphi 0, %s78
      %s95 = sphi 0, %s79
      %s105 = sphi 0, %s107
      %s108 = sphi 0, %s105
      %s109 = sphi 0, %s108
      %s125 = sphi 0, %s109
      %s129 = sphi 0, %s129
      %s131 = sphi 0, %s129
      %s132 = sphi 0, %s131
      %s146 = sphi 0, %s132
      %s150 = sphi 0, %s150
      %s152 = sphi 0, %s150
      %s153 = sphi 0, %s152
      %s167 = sphi 0, %s153
      %s171 = sphi 0, %s171
      %s173 = sphi 0, %s171
      %s174 = sphi 0, %s173
      %s188 = sphi 0, %s174
      %s192 = sphi 0, %s192
      %s194 = sphi 0, %s192
      %s195 = sphi 0, %s194
      %s209 = sphi 0, %s195
      %s213 = sphi 0, %s213
      %s215 = sphi 0, %s213
      %s216 = sphi 0, %s215
      %s230 = sphi 0, %s216
      %s234 = sphi 0, %s234
      %s236 = sphi 0, %s234
      %s237 = sphi 0, %s236
      %s251 = sphi 0, %s237
      %s255 = sphi 0, %s255
      %s257 = sphi 0, %s255
      %s258 = sphi 0, %s257
      %s272 = sphi 0, %s258
      %s276 = sphi 0, %s276
      %s278 = sphi 0, %s276
      %s279 = sphi 0, %s278
      %s293 = sphi 0, %s279
      %s297 = sphi 0, %s297
      %s299 = sphi 0, %s297
      %s300 = sphi 0, %s299
      %s314 = sphi 0, %s300
      %s320 = sphi 0, %s322
      %s323 = sphi 0, %s320
      %s324 = sphi 0, %s323
      %s340 = sphi 0, %s324
    $region4: #{simple_recog_forward.1} parent=1 // loop_header_branch
      %24 = sbr.rel (%p22) target = $region8
    $region5: #{simple_recog_forward.1} parent=1 // loop_body
      %s26 = ssub.s32 %s21, 1
      %s27 = ssub.s32 %s21, 2
      %s34 = sadd.s32 1, %s29
      %p35 = scmp.ge.s32.totalorder %s34, 4
      %s36 = scalar_select %p35, 0, %s34
      %s37 = sadd.s32 1, %s28
      %s38 = scalar_select %p35, %s37, %s28
      %p39 = scmp.ge.s32.totalorder %s38, 2
      %s40 = scalar_select %p39, 0, %s38
      %s41 = ssub.s32 %s28, %s40
      %s42 = ssub.s32 %s29, %s36
      %s43 = sor.u32 %s41, %s42
      %p44 = scmp.eq.s32.totalorder %s43, 0
      %s46 = sadd.s32 %s45, 1
      %s47 = scalar_select %p44, %s45, %s46
      %p50 = pneg %p44
      %p51 = scmp.eq.s32.totalorder %s21, 7
      %p52 = por %p50, %p51
      %p53 = scmp.ne.s32.totalorder %s45, %s48
      %p54 = scmp.eq.s32.totalorder %s21, 0
      %p55 = por %p53, %p54
      %p56 = scmp.ne.s32.totalorder %s45, %s48
      %p57 = scmp.eq.s32.totalorder %s26, 7
      %p58 = por %p56, %p57
      %p59 = scmp.ne.s32.totalorder %s48, %s49
      %p60 = scmp.eq.s32.totalorder %s26, 0
      %p61 = por %p59, %p60
      %p62 = scmp.ne.s32.totalorder %s48, %s49
      %p63 = scmp.eq.s32.totalorder %s27, 7
      %p64 = por %p62, %p63
      %p66 = scmp.ne.s32.totalorder %s49, %s65
      %p67 = scmp.eq.s32.totalorder %s27, 0
      %p68 = por %p66, %p67
      %s69 = sadd.s32 %s29, 1
      %s70 = sadd.s32 %s36, 1
      %s71 = ssub.s32 %s28, %s40
      %s72 = ssub.s32 %s69, %s70
      %s73 = sor.u32 %s71, %s72
      %p74 = scmp.eq.s32.totalorder %s73, 0
      %s76 = sadd.s32 %s75, 1
      %s77 = scalar_select %p74, %s75, %s76
      %p80 = pneg %p74
      %p81 = scmp.eq.s32.totalorder %s21, 7
      %p82 = por %p80, %p81
      %p83 = scmp.ne.s32.totalorder %s75, %s78
      %p84 = scmp.eq.s32.totalorder %s21, 0
      %p85 = por %p83, %p84
      %p86 = scmp.ne.s32.totalorder %s75, %s78
      %p87 = scmp.eq.s32.totalorder %s26, 7
      %p88 = por %p86, %p87
      %p89 = scmp.ne.s32.totalorder %s78, %s79
      %p90 = scmp.eq.s32.totalorder %s26, 0
      %p91 = por %p89, %p90
      %p92 = scmp.ne.s32.totalorder %s78, %s79
      %p93 = scmp.eq.s32.totalorder %s27, 7
      %p94 = por %p92, %p93
      %p96 = scmp.ne.s32.totalorder %s79, %s95
      %p97 = scmp.eq.s32.totalorder %s27, 0
      %p98 = por %p96, %p97
      %s99 = sadd.s32 %s29, 2
      %s100 = sadd.s32 %s36, 2
      %s101 = ssub.s32 %s28, %s40
      %s102 = ssub.s32 %s99, %s100
      %s103 = sor.u32 %s101, %s102
      %p104 = scmp.eq.s32.totalorder %s103, 0
      %s106 = sadd.s32 %s105, 1
      %s107 = scalar_select %p104, %s105, %s106
      %p110 = pneg %p104
      %p111 = scmp.eq.s32.totalorder %s21, 7
      %p112 = por %p110, %p111
      %p113 = scmp.ne.s32.totalorder %s105, %s108
      %p114 = scmp.eq.s32.totalorder %s21, 0
      %p115 = por %p113, %p114
      %p116 = scmp.ne.s32.totalorder %s105, %s108
      %p117 = scmp.eq.s32.totalorder %s26, 7
      %p118 = por %p116, %p117
      %p119 = scmp.ne.s32.totalorder %s108, %s109
      %p120 = scmp.eq.s32.totalorder %s26, 0
      %p121 = por %p119, %p120
      %p122 = scmp.ne.s32.totalorder %s108, %s109
      %p123 = scmp.eq.s32.totalorder %s27, 7
      %p124 = por %p122, %p123
      %p126 = scmp.ne.s32.totalorder %s109, %s125
      %p127 = scmp.eq.s32.totalorder %s27, 0
      %p128 = por %p126, %p127
      %s130 = sadd.s32 %s129, 1
      %p133 = scmp.eq.s32.totalorder %s21, 7
      %p134 = scmp.ne.s32.totalorder %s129, %s131
      %p135 = scmp.eq.s32.totalorder %s21, 0
      %p136 = por %p134, %p135
      %p137 = scmp.ne.s32.totalorder %s129, %s131
      %p138 = scmp.eq.s32.totalorder %s26, 7
      %p139 = por %p137, %p138
      %p140 = scmp.ne.s32.totalorder %s131, %s132
      %p141 = scmp.eq.s32.totalorder %s26, 0
      %p142 = por %p140, %p141
      %p143 = scmp.ne.s32.totalorder %s131, %s132
      %p144 = scmp.eq.s32.totalorder %s27, 7
      %p145 = por %p143, %p144
      %p147 = scmp.ne.s32.totalorder %s132, %s146
      %p148 = scmp.eq.s32.totalorder %s27, 0
      %p149 = por %p147, %p148
      %s151 = sadd.s32 %s150, 1
      %p154 = scmp.eq.s32.totalorder %s21, 7
      %p155 = scmp.ne.s32.totalorder %s150, %s152
      %p156 = scmp.eq.s32.totalorder %s21, 0
      %p157 = por %p155, %p156
      %p158 = scmp.ne.s32.totalorder %s150, %s152
      %p159 = scmp.eq.s32.totalorder %s26, 7
      %p160 = por %p158, %p159
      %p161 = scmp.ne.s32.totalorder %s152, %s153
      %p162 = scmp.eq.s32.totalorder %s26, 0
      %p163 = por %p161, %p162
      %p164 = scmp.ne.s32.totalorder %s152, %s153
      %p165 = scmp.eq.s32.totalorder %s27, 7
      %p166 = por %p164, %p165
      %p168 = scmp.ne.s32.totalorder %s153, %s167
      %p169 = scmp.eq.s32.totalorder %s27, 0
      %p170 = por %p168, %p169
      %s172 = sadd.s32 %s171, 1
      %p175 = scmp.eq.s32.totalorder %s21, 7
      %p176 = scmp.ne.s32.totalorder %s171, %s173
      %p177 = scmp.eq.s32.totalorder %s21, 0
      %p178 = por %p176, %p177
      %p179 = scmp.ne.s32.totalorder %s171, %s173
      %p180 = scmp.eq.s32.totalorder %s26, 7
      %p181 = por %p179, %p180
      %p182 = scmp.ne.s32.totalorder %s173, %s174
      %p183 = scmp.eq.s32.totalorder %s26, 0
      %p184 = por %p182, %p183
      %p185 = scmp.ne.s32.totalorder %s173, %s174
      %p186 = scmp.eq.s32.totalorder %s27, 7
      %p187 = por %p185, %p186
      %p189 = scmp.ne.s32.totalorder %s174, %s188
      %p190 = scmp.eq.s32.totalorder %s27, 0
      %p191 = por %p189, %p190
      %s193 = sadd.s32 %s192, 1
      %p196 = scmp.eq.s32.totalorder %s21, 7
      %p197 = scmp.ne.s32.totalorder %s192, %s194
      %p198 = scmp.eq.s32.totalorder %s21, 0
      %p199 = por %p197, %p198
      %p200 = scmp.ne.s32.totalorder %s192, %s194
      %p201 = scmp.eq.s32.totalorder %s26, 7
      %p202 = por %p200, %p201
      %p203 = scmp.ne.s32.totalorder %s194, %s195
      %p204 = scmp.eq.s32.totalorder %s26, 0
      %p205 = por %p203, %p204
      %p206 = scmp.ne.s32.totalorder %s194, %s195
      %p207 = scmp.eq.s32.totalorder %s27, 7
      %p208 = por %p206, %p207
      %p210 = scmp.ne.s32.totalorder %s195, %s209
      %p211 = scmp.eq.s32.totalorder %s27, 0
      %p212 = por %p210, %p211
      %s214 = sadd.s32 %s213, 1
      %p217 = scmp.eq.s32.totalorder %s21, 7
      %p218 = scmp.ne.s32.totalorder %s213, %s215
      %p219 = scmp.eq.s32.totalorder %s21, 0
      %p220 = por %p218, %p219
      %p221 = scmp.ne.s32.totalorder %s213, %s215
      %p222 = scmp.eq.s32.totalorder %s26, 7
      %p223 = por %p221, %p222
      %p224 = scmp.ne.s32.totalorder %s215, %s216
      %p225 = scmp.eq.s32.totalorder %s26, 0
      %p226 = por %p224, %p225
      %p227 = scmp.ne.s32.totalorder %s215, %s216
      %p228 = scmp.eq.s32.totalorder %s27, 7
      %p229 = por %p227, %p228
      %p231 = scmp.ne.s32.totalorder %s216, %s230
      %p232 = scmp.eq.s32.totalorder %s27, 0
      %p233 = por %p231, %p232
      %s235 = sadd.s32 %s234, 1
      %p238 = scmp.eq.s32.totalorder %s21, 7
      %p239 = scmp.ne.s32.totalorder %s234, %s236
      %p240 = scmp.eq.s32.totalorder %s21, 0
      %p241 = por %p239, %p240
      %p242 = scmp.ne.s32.totalorder %s234, %s236
      %p243 = scmp.eq.s32.totalorder %s26, 7
      %p244 = por %p242, %p243
      %p245 = scmp.ne.s32.totalorder %s236, %s237
      %p246 = scmp.eq.s32.totalorder %s26, 0
      %p247 = por %p245, %p246
      %p248 = scmp.ne.s32.totalorder %s236, %s237
      %p249 = scmp.eq.s32.totalorder %s27, 7
      %p250 = por %p248, %p249
      %p252 = scmp.ne.s32.totalorder %s237, %s251
      %p253 = scmp.eq.s32.totalorder %s27, 0
      %p254 = por %p252, %p253
      %s256 = sadd.s32 %s255, 1
      %p259 = scmp.eq.s32.totalorder %s21, 7
      %p260 = scmp.ne.s32.totalorder %s255, %s257
      %p261 = scmp.eq.s32.totalorder %s21, 0
      %p262 = por %p260, %p261
      %p263 = scmp.ne.s32.totalorder %s255, %s257
      %p264 = scmp.eq.s32.totalorder %s26, 7
      %p265 = por %p263, %p264
      %p266 = scmp.ne.s32.totalorder %s257, %s258
      %p267 = scmp.eq.s32.totalorder %s26, 0
      %p268 = por %p266, %p267
      %p269 = scmp.ne.s32.totalorder %s257, %s258
      %p270 = scmp.eq.s32.totalorder %s27, 7
      %p271 = por %p269, %p270
      %p273 = scmp.ne.s32.totalorder %s258, %s272
      %p274 = scmp.eq.s32.totalorder %s27, 0
      %p275 = por %p273, %p274
      %s277 = sadd.s32 %s276, 1
      %p280 = scmp.eq.s32.totalorder %s21, 7
      %p281 = scmp.ne.s32.totalorder %s276, %s278
      %p282 = scmp.eq.s32.totalorder %s21, 0
      %p283 = por %p281, %p282
      %p284 = scmp.ne.s32.totalorder %s276, %s278
      %p285 = scmp.eq.s32.totalorder %s26, 7
      %p286 = por %p284, %p285
      %p287 = scmp.ne.s32.totalorder %s278, %s279
      %p288 = scmp.eq.s32.totalorder %s26, 0
      %p289 = por %p287, %p288
      %p290 = scmp.ne.s32.totalorder %s278, %s279
      %p291 = scmp.eq.s32.totalorder %s27, 7
      %p292 = por %p290, %p291
      %p294 = scmp.ne.s32.totalorder %s279, %s293
      %p295 = scmp.eq.s32.totalorder %s27, 0
      %p296 = por %p294, %p295
      %s298 = sadd.s32 %s297, 1
      %p301 = scmp.eq.s32.totalorder %s21, 7
      %p302 = scmp.ne.s32.totalorder %s297, %s299
      %p303 = scmp.eq.s32.totalorder %s21, 0
      %p304 = por %p302, %p303
      %p305 = scmp.ne.s32.totalorder %s297, %s299
      %p306 = scmp.eq.s32.totalorder %s26, 7
      %p307 = por %p305, %p306
      %p308 = scmp.ne.s32.totalorder %s299, %s300
      %p309 = scmp.eq.s32.totalorder %s26, 0
      %p310 = por %p308, %p309
      %p311 = scmp.ne.s32.totalorder %s299, %s300
      %p312 = scmp.eq.s32.totalorder %s27, 7
      %p313 = por %p311, %p312
      %p315 = scmp.ne.s32.totalorder %s300, %s314
      %p316 = scmp.eq.s32.totalorder %s27, 0
      %p317 = por %p315, %p316
      %s318 = ssub.s32 %s28, %s40
      %p319 = scmp.eq.s32.totalorder %s318, 0
      %s321 = sadd.s32 %s320, 1
      %s322 = scalar_select %p319, %s320, %s321
      %p325 = pneg %p319
      %p326 = scmp.eq.s32.totalorder %s21, 7
      %p327 = por %p325, %p326
      %p328 = scmp.ne.s32.totalorder %s320, %s323
      %p329 = scmp.eq.s32.totalorder %s21, 0
      %p330 = por %p328, %p329
      %p331 = scmp.ne.s32.totalorder %s320, %s323
      %p332 = scmp.eq.s32.totalorder %s26, 7
      %p333 = por %p331, %p332
      %p334 = scmp.ne.s32.totalorder %s323, %s324
      %p335 = scmp.eq.s32.totalorder %s26, 0
      %p336 = por %p334, %p335
      %p337 = scmp.ne.s32.totalorder %s323, %s324
      %p338 = scmp.eq.s32.totalorder %s27, 7
      %p339 = por %p337, %p338
      %p341 = scmp.ne.s32.totalorder %s324, %s340
      %p342 = scmp.eq.s32.totalorder %s27, 0
      %p343 = por %p341, %p342
      %p344 = scmp.le.s32.totalorder 1, %s21
      %p345 = scmp.lt.s32.totalorder %s21, 9
      %p346 = pnand %p344, %p345
      %p347 = pneg %p346
      // Predicated region
      $region9: #{simple_recog_forward.1} parent=5 // pred_check
        _
      $region10: #{simple_recog_forward.1} parent=5 // pred_check_branch
        %349 = sbr.rel (%p346) target = $region12
      $region11: #{simple_recog_forward.1} parent=5 // pred_region
        %s350 = ssub.s32 %s21, 1
        // Predicated region
        $region13: #{simple_recog_forward.1} parent=11 // pred_check
          %p351 = pneg %p142
        $region14: #{simple_recog_forward.1} parent=11 // pred_check_branch
          %353 = sbr.rel (%p351) target = $region16
        $region15: #{simple_recog_forward.1} parent=11 // pred_region
          _
        $region16: #{simple_recog_forward.1} parent=11 // pred_fallthru
          _
        // Predicated region
        $region17: #{simple_recog_forward.1} parent=11 // pred_check
          %p354 = pneg %p163
        $region18: #{simple_recog_forward.1} parent=11 // pred_check_branch
          %356 = sbr.rel (%p354) target = $region20
        $region19: #{simple_recog_forward.1} parent=11 // pred_region
          _
        $region20: #{simple_recog_forward.1} parent=11 // pred_fallthru
          _
        // Predicated region
        $region21: #{simple_recog_forward.1} parent=11 // pred_check
          %p357 = pneg %p184
        $region22: #{simple_recog_forward.1} parent=11 // pred_check_branch
          %359 = sbr.rel (%p357) target = $region24
        $region23: #{simple_recog_forward.1} parent=11 // pred_region
          _
        $region24: #{simple_recog_forward.1} parent=11 // pred_fallthru
          _
        // Predicated region
        $region25: #{simple_recog_forward.1} parent=11 // pred_check
          %p360 = pneg %p205
        $region26: #{simple_recog_forward.1} parent=11 // pred_check_branch
          %362 = sbr.rel (%p360) target = $region28
        $region27: #{simple_recog_forward.1} parent=11 // pred_region
          _
        $region28: #{simple_recog_forward.1} parent=11 // pred_fallthru
          _
        // Predicated region
        $region29: #{simple_recog_forward.1} parent=11 // pred_check
          %p363 = pneg %p226
        $region30: #{simple_recog_forward.1} parent=11 // pred_check_branch
          %365 = sbr.rel (%p363) target = $region32
        $region31: #{simple_recog_forward.1} parent=11 // pred_region
          _
        $region32: #{simple_recog_forward.1} parent=11 // pred_fallthru
          _
        // Predicated region
        $region33: #{simple_recog_forward.1} parent=11 // pred_check
          %p366 = pneg %p247
        $region34: #{simple_recog_forward.1} parent=11 // pred_check_branch
          %368 = sbr.rel (%p366) target = $region36
        $region35: #{simple_recog_forward.1} parent=11 // pred_region
          _
        $region36: #{simple_recog_forward.1} parent=11 // pred_fallthru
          _
        // Predicated region
        $region37: #{simple_recog_forward.1} parent=11 // pred_check
          %p369 = pneg %p268
        $region38: #{simple_recog_forward.1} parent=11 // pred_check_branch
          %371 = sbr.rel (%p369) target = $region40
        $region39: #{simple_recog_forward.1} parent=11 // pred_region
          _
        $region40: #{simple_recog_forward.1} parent=11 // pred_fallthru
          _
        // Predicated region
        $region41: #{simple_recog_forward.1} parent=11 // pred_check
          %p372 = pneg %p289
        $region42: #{simple_recog_forward.1} parent=11 // pred_check_branch
          %374 = sbr.rel (%p372) target = $region44
        $region43: #{simple_recog_forward.1} parent=11 // pred_region
          _
        $region44: #{simple_recog_forward.1} parent=11 // pred_fallthru
          _
        // Predicated region
        $region45: #{simple_recog_forward.1} parent=11 // pred_check
          %p375 = pneg %p310
        $region46: #{simple_recog_forward.1} parent=11 // pred_check_branch
          %377 = sbr.rel (%p375) target = $region48
        $region47: #{simple_recog_forward.1} parent=11 // pred_region
          _
        $region48: #{simple_recog_forward.1} parent=11 // pred_fallthru
          _
      $region12: #{simple_recog_forward.1} parent=5 // pred_fallthru
        _
      %p378 = scmp.lt.s32.totalorder %s21, 8
      // Predicated region
      $region49: #{simple_recog_forward.1} parent=5 // pred_check
        %p379 = pneg %p378
      $region50: #{simple_recog_forward.1} parent=5 // pred_check_branch
        %381 = sbr.rel (%p379) target = $region52
      $region51: #{simple_recog_forward.1} parent=5 // pred_region
        // Predicated region
        $region53: #{simple_recog_forward.1} parent=51 // pred_check
          %p382 = pneg %p55
        $region54: #{simple_recog_forward.1} parent=51 // pred_check_branch
          %384 = sbr.rel (%p382) target = $region56
        $region55: #{simple_recog_forward.1} parent=51 // pred_region
          %s385 = sand.u32 %s45, 1
          %s386 = sand.u32 %s45, 1
          %s387 = smul.addr %s386, 88
          %s388 = scalar_lea.vmem [#allocation4], %s387
          %s389 = smul.u32 11, %s29
          %s390 = smul.addr %s28, 132
          %s391 = sadd.s32 %s389, %s390
          %s392 = smul.addr %s391, 4
          %s393 = scalar_lea.vmem %s0, %s392
          // Predicated region
          $region57: #{simple_recog_forward.1} parent=55 // pred_check
            _
          $region58: #{simple_recog_forward.1} parent=55 // pred_check_branch
            %395 = sbr.rel (0) target = $region60
          $region59: #{simple_recog_forward.1} parent=55 // pred_region
            // Predicated region
            $region61: #{simple_recog_forward.1} parent=59 // pred_check
              _
            $region62: #{simple_recog_forward.1} parent=59 // pred_check_branch
              %397 = sbr.rel target = $region64
            $region63: #{simple_recog_forward.1} parent=59 // pred_region
              // Predicated region
              $region76: #{simple_recog_forward.1} parent=63 // pred_check
                _
              $region77: #{simple_recog_forward.1} parent=63 // pred_check_branch
                %455 = sbr.rel (0) target = $region79
              $region78: #{simple_recog_forward.1} parent=63 // pred_region
                loop: start=0, step=1, limit=1
                $region80: #{simple_recog_forward.1} parent=78 // loop_pre_header
                  _
                $region81: #{simple_recog_forward.1} parent=78 // loop_header
                  %s457 = sphi 0, %s461
                  %p458 = scmp.ge.s32.totalorder %s457, 1
                  %s462 = sphi %s393, %s393
                  %s463 = sphi %s388, %s388
                $region82: #{simple_recog_forward.1} parent=78 // loop_header_branch
                  %460 = sbr.rel (%p458) target = $region86
                $region83: #{simple_recog_forward.1} parent=78 // loop_body
                  _
                $region84: #{simple_recog_forward.1} parent=78 // loop_footer
                  %s461 = sadd.s32 1, %s457
                $region85: #{simple_recog_forward.1} parent=78 // loop_footer_branch
                  %456 = sbr.rel target = $region81
                $region86: #{simple_recog_forward.1} parent=78 // loop_exit
                  _
                %s465 = ssub.s32 16, 1
                loop: start=0, step=1, limit=1
                $region87: #{simple_recog_forward.1} parent=78 // loop_pre_header
                  _
                $region88: #{simple_recog_forward.1} parent=78 // loop_header
                  %s467 = sphi 0, %s471
                  %p468 = scmp.ge.s32.totalorder %s467, 1
                  %s472 = sphi %s393, %s393
                  %s473 = sphi %s388, %s388
                $region89: #{simple_recog_forward.1} parent=78 // loop_header_branch
                  %470 = sbr.rel (%p468) target = $region93
                $region90: #{simple_recog_forward.1} parent=78 // loop_body
                  %v474 = vld [vmem:[%s472] sm:%s465]
                  %475 = vst [vmem:[%s473] sm:%s465] %v474
                  %v476 = vld [vmem:[%s472 + $0x4] sm:%s465]
                  %477 = vst [vmem:[%s473 + $0x4] sm:%s465] %v476
                  %v478 = vld [vmem:[%s472 + $0x8] sm:%s465]
                  %479 = vst [vmem:[%s473 + $0x8] sm:%s465] %v478
                  %v480 = vld [vmem:[%s472 + $0xc] sm:%s465]
                  %481 = vst [vmem:[%s473 + $0xc] sm:%s465] %v480
                  %v482 = vld [vmem:[%s472 + $0x10] sm:%s465]
                  %483 = vst [vmem:[%s473 + $0x10] sm:%s465] %v482
                  %v484 = vld [vmem:[%s472 + $0x14] sm:%s465]
                  %485 = vst [vmem:[%s473 + $0x14] sm:%s465] %v484
                  %v486 = vld [vmem:[%s472 + $0x18] sm:%s465]
                  %487 = vst [vmem:[%s473 + $0x18] sm:%s465] %v486
                  %v488 = vld [vmem:[%s472 + $0x1c] sm:%s465]
                  %489 = vst [vmem:[%s473 + $0x1c] sm:%s465] %v488
                  %v490 = vld [vmem:[%s472 + $0x20] sm:%s465]
                  %491 = vst [vmem:[%s473 + $0x20] sm:%s465] %v490
                  %v492 = vld [vmem:[%s472 + $0x24] sm:%s465]
                  %493 = vst [vmem:[%s473 + $0x24] sm:%s465] %v492
                  %v494 = vld [vmem:[%s472 + $0x28] sm:%s465]
                  %495 = vst [vmem:[%s473 + $0x28] sm:%s465] %v494
                  %v496 = vld [vmem:[%s472 + $0x108] sm:%s465]
                  %497 = vst [vmem:[%s473 + $0x2c] sm:%s465] %v496
                  %v498 = vld [vmem:[%s472 + $0x10c] sm:%s465]
                  %499 = vst [vmem:[%s473 + $0x30] sm:%s465] %v498
                  %v500 = vld [vmem:[%s472 + $0x110] sm:%s465]
                  %501 = vst [vmem:[%s473 + $0x34] sm:%s465] %v500
                  %v502 = vld [vmem:[%s472 + $0x114] sm:%s465]
                  %503 = vst [vmem:[%s473 + $0x38] sm:%s465] %v502
                  %v504 = vld [vmem:[%s472 + $0x118] sm:%s465]
                  %505 = vst [vmem:[%s473 + $0x3c] sm:%s465] %v504
                  %v506 = vld [vmem:[%s472 + $0x11c] sm:%s465]
                  %507 = vst [vmem:[%s473 + $0x40] sm:%s465] %v506
                  %v508 = vld [vmem:[%s472 + $0x120] sm:%s465]
                  %509 = vst [vmem:[%s473 + $0x44] sm:%s465] %v508
                  %v510 = vld [vmem:[%s472 + $0x124] sm:%s465]
                  %511 = vst [vmem:[%s473 + $0x48] sm:%s465] %v510
                  %v512 = vld [vmem:[%s472 + $0x128] sm:%s465]
                  %513 = vst [vmem:[%s473 + $0x4c] sm:%s465] %v512
                  %v514 = vld [vmem:[%s472 + $0x12c] sm:%s465]
                  %515 = vst [vmem:[%s473 + $0x50] sm:%s465] %v514
                  %v516 = vld [vmem:[%s472 + $0x130] sm:%s465]
                  %517 = vst [vmem:[%s473 + $0x54] sm:%s465] %v516
                $region91: #{simple_recog_forward.1} parent=78 // loop_footer
                  %s471 = sadd.s32 1, %s467
                $region92: #{simple_recog_forward.1} parent=78 // loop_footer_branch
                  %466 = sbr.rel target = $region88
                $region93: #{simple_recog_forward.1} parent=78 // loop_exit
                  _
              $region79: #{simple_recog_forward.1} parent=63 // pred_fallthru
                _
            $region64: #{simple_recog_forward.1} parent=59 // pred_fallthru
              _
            // Predicated region
            $region65: #{simple_recog_forward.1} parent=59 // pred_check
              _
            $region66: #{simple_recog_forward.1} parent=59 // pred_check_branch
              %399 = sbr.rel (0) target = $region68
            $region67: #{simple_recog_forward.1} parent=59 // pred_region
              %s401 = ssub.s32 16, 1
              loop: start=0, step=1, limit=1
              $region69: #{simple_recog_forward.1} parent=67 // loop_pre_header
                _
              $region70: #{simple_recog_forward.1} parent=67 // loop_header
                %s403 = sphi 0, %s407
                %p404 = scmp.ge.s32.totalorder %s403, 1
                %s408 = sphi %s393, %s393
                %s409 = sphi %s388, %s388
              $region71: #{simple_recog_forward.1} parent=67 // loop_header_branch
                %406 = sbr.rel (%p404) target = $region75
              $region72: #{simple_recog_forward.1} parent=67 // loop_body
                %v410 = vld [vmem:[%s408] sm:%s401]
                %411 = vst [vmem:[%s409] sm:%s401] %v410
                %v412 = vld [vmem:[%s408 + $0x4] sm:%s401]
                %413 = vst [vmem:[%s409 + $0x4] sm:%s401] %v412
                %v414 = vld [vmem:[%s408 + $0x8] sm:%s401]
                %415 = vst [vmem:[%s409 + $0x8] sm:%s401] %v414
                %v416 = vld [vmem:[%s408 + $0xc] sm:%s401]
                %417 = vst [vmem:[%s409 + $0xc] sm:%s401] %v416
                %v418 = vld [vmem:[%s408 + $0x10] sm:%s401]
                %419 = vst [vmem:[%s409 + $0x10] sm:%s401] %v418
                %v420 = vld [vmem:[%s408 + $0x14] sm:%s401]
                %421 = vst [vmem:[%s409 + $0x14] sm:%s401] %v420
                %v422 = vld [vmem:[%s408 + $0x18] sm:%s401]
                %423 = vst [vmem:[%s409 + $0x18] sm:%s401] %v422
                %v424 = vld [vmem:[%s408 + $0x1c] sm:%s401]
                %425 = vst [vmem:[%s409 + $0x1c] sm:%s401] %v424
                %v426 = vld [vmem:[%s408 + $0x20] sm:%s401]
                %427 = vst [vmem:[%s409 + $0x20] sm:%s401] %v426
                %v428 = vld [vmem:[%s408 + $0x24] sm:%s401]
                %429 = vst [vmem:[%s409 + $0x24] sm:%s401] %v428
                %v430 = vld [vmem:[%s408 + $0x28] sm:%s401]
                %431 = vst [vmem:[%s409 + $0x28] sm:%s401] %v430
                %v432 = vld [vmem:[%s408 + $0x108] sm:%s401]
                %433 = vst [vmem:[%s409 + $0x2c] sm:%s401] %v432
                %v434 = vld [vmem:[%s408 + $0x10c] sm:%s401]
                %435 = vst [vmem:[%s409 + $0x30] sm:%s401] %v434
                %v436 = vld [vmem:[%s408 + $0x110] sm:%s401]
                %437 = vst [vmem:[%s409 + $0x34] sm:%s401] %v436
                %v438 = vld [vmem:[%s408 + $0x114] sm:%s401]
                %439 = vst [vmem:[%s409 + $0x38] sm:%s401] %v438
                %v440 = vld [vmem:[%s408 + $0x118] sm:%s401]
                %441 = vst [vmem:[%s409 + $0x3c] sm:%s401] %v440
                %v442 = vld [vmem:[%s408 + $0x11c] sm:%s401]
                %443 = vst [vmem:[%s409 + $0x40] sm:%s401] %v442
                %v444 = vld [vmem:[%s408 + $0x120] sm:%s401]
                %445 = vst [vmem:[%s409 + $0x44] sm:%s401] %v444
                %v446 = vld [vmem:[%s408 + $0x124] sm:%s401]
                %447 = vst [vmem:[%s409 + $0x48] sm:%s401] %v446
                %v448 = vld [vmem:[%s408 + $0x128] sm:%s401]
                %449 = vst [vmem:[%s409 + $0x4c] sm:%s401] %v448
                %v450 = vld [vmem:[%s408 + $0x12c] sm:%s401]
                %451 = vst [vmem:[%s409 + $0x50] sm:%s401] %v450
                %v452 = vld [vmem:[%s408 + $0x130] sm:%s401]
                %453 = vst [vmem:[%s409 + $0x54] sm:%s401] %v452
              $region73: #{simple_recog_forward.1} parent=67 // loop_footer
                %s407 = sadd.s32 1, %s403
              $region74: #{simple_recog_forward.1} parent=67 // loop_footer_branch
                %402 = sbr.rel target = $region70
              $region75: #{simple_recog_forward.1} parent=67 // loop_exit
                _
            $region68: #{simple_recog_forward.1} parent=59 // pred_fallthru
              _
          $region60: #{simple_recog_forward.1} parent=55 // pred_fallthru
            _
          %518 = vnop
        $region56: #{simple_recog_forward.1} parent=51 // pred_fallthru
          _
        // Predicated region
        $region94: #{simple_recog_forward.1} parent=51 // pred_check
          %p519 = pneg %p85
        $region95: #{simple_recog_forward.1} parent=51 // pred_check_branch
          %521 = sbr.rel (%p519) target = $region97
        $region96: #{simple_recog_forward.1} parent=51 // pred_region
          %s522 = sand.u32 %s75, 1
          %s523 = sand.u32 %s75, 1
          %s524 = smul.addr %s523, 88
          %s525 = scalar_lea.vmem [#allocation5], %s524
          %s526 = sadd.s32 %s29, 1
          %s527 = smul.u32 11, %s526
          %s528 = smul.addr %s28, 132
          %s529 = sadd.s32 %s527, %s528
          %s530 = smul.addr %s529, 4
          %s531 = scalar_lea.vmem %s1, %s530
          // Predicated region
          $region98: #{simple_recog_forward.1} parent=96 // pred_check
            _
          $region99: #{simple_recog_forward.1} parent=96 // pred_check_branch
            %533 = sbr.rel (0) target = $region101
          $region100: #{simple_recog_forward.1} parent=96 // pred_region
            // Predicated region
            $region102: #{simple_recog_forward.1} parent=100 // pred_check
              _
            $region103: #{simple_recog_forward.1} parent=100 // pred_check_branch
              %535 = sbr.rel target = $region105
            $region104: #{simple_recog_forward.1} parent=100 // pred_region
              // Predicated region
              $region117: #{simple_recog_forward.1} parent=104 // pred_check
                _
              $region118: #{simple_recog_forward.1} parent=104 // pred_check_branch
                %593 = sbr.rel (0) target = $region120
              $region119: #{simple_recog_forward.1} parent=104 // pred_region
                loop: start=0, step=1, limit=1
                $region121: #{simple_recog_forward.1} parent=119 // loop_pre_header
                  _
                $region122: #{simple_recog_forward.1} parent=119 // loop_header
                  %s595 = sphi 0, %s599
                  %p596 = scmp.ge.s32.totalorder %s595, 1
                  %s600 = sphi %s531, %s531
                  %s601 = sphi %s525, %s525
                $region123: #{simple_recog_forward.1} parent=119 // loop_header_branch
                  %598 = sbr.rel (%p596) target = $region127
                $region124: #{simple_recog_forward.1} parent=119 // loop_body
                  _
                $region125: #{simple_recog_forward.1} parent=119 // loop_footer
                  %s599 = sadd.s32 1, %s595
                $region126: #{simple_recog_forward.1} parent=119 // loop_footer_branch
                  %594 = sbr.rel target = $region122
                $region127: #{simple_recog_forward.1} parent=119 // loop_exit
                  _
                %s603 = ssub.s32 16, 1
                loop: start=0, step=1, limit=1
                $region128: #{simple_recog_forward.1} parent=119 // loop_pre_header
                  _
                $region129: #{simple_recog_forward.1} parent=119 // loop_header
                  %s605 = sphi 0, %s609
                  %p606 = scmp.ge.s32.totalorder %s605, 1
                  %s610 = sphi %s531, %s531
                  %s611 = sphi %s525, %s525
                $region130: #{simple_recog_forward.1} parent=119 // loop_header_branch
                  %608 = sbr.rel (%p606) target = $region134
                $region131: #{simple_recog_forward.1} parent=119 // loop_body
                  %v612 = vld [vmem:[%s610] sm:%s603]
                  %613 = vst [vmem:[%s611] sm:%s603] %v612
                  %v614 = vld [vmem:[%s610 + $0x4] sm:%s603]
                  %615 = vst [vmem:[%s611 + $0x4] sm:%s603] %v614
                  %v616 = vld [vmem:[%s610 + $0x8] sm:%s603]
                  %617 = vst [vmem:[%s611 + $0x8] sm:%s603] %v616
                  %v618 = vld [vmem:[%s610 + $0xc] sm:%s603]
                  %619 = vst [vmem:[%s611 + $0xc] sm:%s603] %v618
                  %v620 = vld [vmem:[%s610 + $0x10] sm:%s603]
                  %621 = vst [vmem:[%s611 + $0x10] sm:%s603] %v620
                  %v622 = vld [vmem:[%s610 + $0x14] sm:%s603]
                  %623 = vst [vmem:[%s611 + $0x14] sm:%s603] %v622
                  %v624 = vld [vmem:[%s610 + $0x18] sm:%s603]
                  %625 = vst [vmem:[%s611 + $0x18] sm:%s603] %v624
                  %v626 = vld [vmem:[%s610 + $0x1c] sm:%s603]
                  %627 = vst [vmem:[%s611 + $0x1c] sm:%s603] %v626
                  %v628 = vld [vmem:[%s610 + $0x20] sm:%s603]
                  %629 = vst [vmem:[%s611 + $0x20] sm:%s603] %v628
                  %v630 = vld [vmem:[%s610 + $0x24] sm:%s603]
                  %631 = vst [vmem:[%s611 + $0x24] sm:%s603] %v630
                  %v632 = vld [vmem:[%s610 + $0x28] sm:%s603]
                  %633 = vst [vmem:[%s611 + $0x28] sm:%s603] %v632
                  %v634 = vld [vmem:[%s610 + $0x108] sm:%s603]
                  %635 = vst [vmem:[%s611 + $0x2c] sm:%s603] %v634
                  %v636 = vld [vmem:[%s610 + $0x10c] sm:%s603]
                  %637 = vst [vmem:[%s611 + $0x30] sm:%s603] %v636
                  %v638 = vld [vmem:[%s610 + $0x110] sm:%s603]
                  %639 = vst [vmem:[%s611 + $0x34] sm:%s603] %v638
                  %v640 = vld [vmem:[%s610 + $0x114] sm:%s603]
                  %641 = vst [vmem:[%s611 + $0x38] sm:%s603] %v640
                  %v642 = vld [vmem:[%s610 + $0x118] sm:%s603]
                  %643 = vst [vmem:[%s611 + $0x3c] sm:%s603] %v642
                  %v644 = vld [vmem:[%s610 + $0x11c] sm:%s603]
                  %645 = vst [vmem:[%s611 + $0x40] sm:%s603] %v644
                  %v646 = vld [vmem:[%s610 + $0x120] sm:%s603]
                  %647 = vst [vmem:[%s611 + $0x44] sm:%s603] %v646
                  %v648 = vld [vmem:[%s610 + $0x124] sm:%s603]
                  %649 = vst [vmem:[%s611 + $0x48] sm:%s603] %v648
                  %v650 = vld [vmem:[%s610 + $0x128] sm:%s603]
                  %651 = vst [vmem:[%s611 + $0x4c] sm:%s603] %v650
                  %v652 = vld [vmem:[%s610 + $0x12c] sm:%s603]
                  %653 = vst [vmem:[%s611 + $0x50] sm:%s603] %v652
                  %v654 = vld [vmem:[%s610 + $0x130] sm:%s603]
                  %655 = vst [vmem:[%s611 + $0x54] sm:%s603] %v654
                $region132: #{simple_recog_forward.1} parent=119 // loop_footer
                  %s609 = sadd.s32 1, %s605
                $region133: #{simple_recog_forward.1} parent=119 // loop_footer_branch
                  %604 = sbr.rel target = $region129
                $region134: #{simple_recog_forward.1} parent=119 // loop_exit
                  _
              $region120: #{simple_recog_forward.1} parent=104 // pred_fallthru
                _
            $region105: #{simple_recog_forward.1} parent=100 // pred_fallthru
              _
            // Predicated region
            $region106: #{simple_recog_forward.1} parent=100 // pred_check
              _
            $region107: #{simple_recog_forward.1} parent=100 // pred_check_branch
              %537 = sbr.rel (0) target = $region109
            $region108: #{simple_recog_forward.1} parent=100 // pred_region
              %s539 = ssub.s32 16, 1
              loop: start=0, step=1, limit=1
              $region110: #{simple_recog_forward.1} parent=108 // loop_pre_header
                _
              $region111: #{simple_recog_forward.1} parent=108 // loop_header
                %s541 = sphi 0, %s545
                %p542 = scmp.ge.s32.totalorder %s541, 1
                %s546 = sphi %s531, %s531
                %s547 = sphi %s525, %s525
              $region112: #{simple_recog_forward.1} parent=108 // loop_header_branch
                %544 = sbr.rel (%p542) target = $region116
              $region113: #{simple_recog_forward.1} parent=108 // loop_body
                %v548 = vld [vmem:[%s546] sm:%s539]
                %549 = vst [vmem:[%s547] sm:%s539] %v548
                %v550 = vld [vmem:[%s546 + $0x4] sm:%s539]
                %551 = vst [vmem:[%s547 + $0x4] sm:%s539] %v550
                %v552 = vld [vmem:[%s546 + $0x8] sm:%s539]
                %553 = vst [vmem:[%s547 + $0x8] sm:%s539] %v552
                %v554 = vld [vmem:[%s546 + $0xc] sm:%s539]
                %555 = vst [vmem:[%s547 + $0xc] sm:%s539] %v554
                %v556 = vld [vmem:[%s546 + $0x10] sm:%s539]
                %557 = vst [vmem:[%s547 + $0x10] sm:%s539] %v556
                %v558 = vld [vmem:[%s546 + $0x14] sm:%s539]
                %559 = vst [vmem:[%s547 + $0x14] sm:%s539] %v558
                %v560 = vld [vmem:[%s546 + $0x18] sm:%s539]
                %561 = vst [vmem:[%s547 + $0x18] sm:%s539] %v560
                %v562 = vld [vmem:[%s546 + $0x1c] sm:%s539]
                %563 = vst [vmem:[%s547 + $0x1c] sm:%s539] %v562
                %v564 = vld [vmem:[%s546 + $0x20] sm:%s539]
                %565 = vst [vmem:[%s547 + $0x20] sm:%s539] %v564
                %v566 = vld [vmem:[%s546 + $0x24] sm:%s539]
                %567 = vst [vmem:[%s547 + $0x24] sm:%s539] %v566
                %v568 = vld [vmem:[%s546 + $0x28] sm:%s539]
                %569 = vst [vmem:[%s547 + $0x28] sm:%s539] %v568
                %v570 = vld [vmem:[%s546 + $0x108] sm:%s539]
                %571 = vst [vmem:[%s547 + $0x2c] sm:%s539] %v570
                %v572 = vld [vmem:[%s546 + $0x10c] sm:%s539]
                %573 = vst [vmem:[%s547 + $0x30] sm:%s539] %v572
                %v574 = vld [vmem:[%s546 + $0x110] sm:%s539]
                %575 = vst [vmem:[%s547 + $0x34] sm:%s539] %v574
                %v576 = vld [vmem:[%s546 + $0x114] sm:%s539]
                %577 = vst [vmem:[%s547 + $0x38] sm:%s539] %v576
                %v578 = vld [vmem:[%s546 + $0x118] sm:%s539]
                %579 = vst [vmem:[%s547 + $0x3c] sm:%s539] %v578
                %v580 = vld [vmem:[%s546 + $0x11c] sm:%s539]
                %581 = vst [vmem:[%s547 + $0x40] sm:%s539] %v580
                %v582 = vld [vmem:[%s546 + $0x120] sm:%s539]
                %583 = vst [vmem:[%s547 + $0x44] sm:%s539] %v582
                %v584 = vld [vmem:[%s546 + $0x124] sm:%s539]
                %585 = vst [vmem:[%s547 + $0x48] sm:%s539] %v584
                %v586 = vld [vmem:[%s546 + $0x128] sm:%s539]
                %587 = vst [vmem:[%s547 + $0x4c] sm:%s539] %v586
                %v588 = vld [vmem:[%s546 + $0x12c] sm:%s539]
                %589 = vst [vmem:[%s547 + $0x50] sm:%s539] %v588
                %v590 = vld [vmem:[%s546 + $0x130] sm:%s539]
                %591 = vst [vmem:[%s547 + $0x54] sm:%s539] %v590
              $region114: #{simple_recog_forward.1} parent=108 // loop_footer
                %s545 = sadd.s32 1, %s541
              $region115: #{simple_recog_forward.1} parent=108 // loop_footer_branch
                %540 = sbr.rel target = $region111
              $region116: #{simple_recog_forward.1} parent=108 // loop_exit
                _
            $region109: #{simple_recog_forward.1} parent=100 // pred_fallthru
              _
          $region101: #{simple_recog_forward.1} parent=96 // pred_fallthru
            _
          %656 = vnop
        $region97: #{simple_recog_forward.1} parent=51 // pred_fallthru
          _
        // Predicated region
        $region135: #{simple_recog_forward.1} parent=51 // pred_check
          %p657 = pneg %p115
        $region136: #{simple_recog_forward.1} parent=51 // pred_check_branch
          %659 = sbr.rel (%p657) target = $region138
        $region137: #{simple_recog_forward.1} parent=51 // pred_region
          %s660 = sand.u32 %s105, 1
          %s661 = sand.u32 %s105, 1
          %s662 = smul.addr %s661, 88
          %s663 = scalar_lea.vmem [#allocation6], %s662
          %s664 = sadd.s32 %s29, 2
          %s665 = smul.u32 11, %s664
          %s666 = smul.addr %s28, 132
          %s667 = sadd.s32 %s665, %s666
          %s668 = smul.addr %s667, 4
          %s669 = scalar_lea.vmem %s2, %s668
          // Predicated region
          $region139: #{simple_recog_forward.1} parent=137 // pred_check
            _
          $region140: #{simple_recog_forward.1} parent=137 // pred_check_branch
            %671 = sbr.rel (0) target = $region142
          $region141: #{simple_recog_forward.1} parent=137 // pred_region
            // Predicated region
            $region143: #{simple_recog_forward.1} parent=141 // pred_check
              _
            $region144: #{simple_recog_forward.1} parent=141 // pred_check_branch
              %673 = sbr.rel target = $region146
            $region145: #{simple_recog_forward.1} parent=141 // pred_region
              // Predicated region
              $region158: #{simple_recog_forward.1} parent=145 // pred_check
                _
              $region159: #{simple_recog_forward.1} parent=145 // pred_check_branch
                %731 = sbr.rel (0) target = $region161
              $region160: #{simple_recog_forward.1} parent=145 // pred_region
                loop: start=0, step=1, limit=1
                $region162: #{simple_recog_forward.1} parent=160 // loop_pre_header
                  _
                $region163: #{simple_recog_forward.1} parent=160 // loop_header
                  %s733 = sphi 0, %s737
                  %p734 = scmp.ge.s32.totalorder %s733, 1
                  %s738 = sphi %s669, %s669
                  %s739 = sphi %s663, %s663
                $region164: #{simple_recog_forward.1} parent=160 // loop_header_branch
                  %736 = sbr.rel (%p734) target = $region168
                $region165: #{simple_recog_forward.1} parent=160 // loop_body
                  _
                $region166: #{simple_recog_forward.1} parent=160 // loop_footer
                  %s737 = sadd.s32 1, %s733
                $region167: #{simple_recog_forward.1} parent=160 // loop_footer_branch
                  %732 = sbr.rel target = $region163
                $region168: #{simple_recog_forward.1} parent=160 // loop_exit
                  _
                %s741 = ssub.s32 16, 1
                loop: start=0, step=1, limit=1
                $region169: #{simple_recog_forward.1} parent=160 // loop_pre_header
                  _
                $region170: #{simple_recog_forward.1} parent=160 // loop_header
                  %s743 = sphi 0, %s747
                  %p744 = scmp.ge.s32.totalorder %s743, 1
                  %s748 = sphi %s669, %s669
                  %s749 = sphi %s663, %s663
                $region171: #{simple_recog_forward.1} parent=160 // loop_header_branch
                  %746 = sbr.rel (%p744) target = $region175
                $region172: #{simple_recog_forward.1} parent=160 // loop_body
                  %v750 = vld [vmem:[%s748] sm:%s741]
                  %751 = vst [vmem:[%s749] sm:%s741] %v750
                  %v752 = vld [vmem:[%s748 + $0x4] sm:%s741]
                  %753 = vst [vmem:[%s749 + $0x4] sm:%s741] %v752
                  %v754 = vld [vmem:[%s748 + $0x8] sm:%s741]
                  %755 = vst [vmem:[%s749 + $0x8] sm:%s741] %v754
                  %v756 = vld [vmem:[%s748 + $0xc] sm:%s741]
                  %757 = vst [vmem:[%s749 + $0xc] sm:%s741] %v756
                  %v758 = vld [vmem:[%s748 + $0x10] sm:%s741]
                  %759 = vst [vmem:[%s749 + $0x10] sm:%s741] %v758
                  %v760 = vld [vmem:[%s748 + $0x14] sm:%s741]
                  %761 = vst [vmem:[%s749 + $0x14] sm:%s741] %v760
                  %v762 = vld [vmem:[%s748 + $0x18] sm:%s741]
                  %763 = vst [vmem:[%s749 + $0x18] sm:%s741] %v762
                  %v764 = vld [vmem:[%s748 + $0x1c] sm:%s741]
                  %765 = vst [vmem:[%s749 + $0x1c] sm:%s741] %v764
                  %v766 = vld [vmem:[%s748 + $0x20] sm:%s741]
                  %767 = vst [vmem:[%s749 + $0x20] sm:%s741] %v766
                  %v768 = vld [vmem:[%s748 + $0x24] sm:%s741]
                  %769 = vst [vmem:[%s749 + $0x24] sm:%s741] %v768
                  %v770 = vld [vmem:[%s748 + $0x28] sm:%s741]
                  %771 = vst [vmem:[%s749 + $0x28] sm:%s741] %v770
                  %v772 = vld [vmem:[%s748 + $0x108] sm:%s741]
                  %773 = vst [vmem:[%s749 + $0x2c] sm:%s741] %v772
                  %v774 = vld [vmem:[%s748 + $0x10c] sm:%s741]
                  %775 = vst [vmem:[%s749 + $0x30] sm:%s741] %v774
                  %v776 = vld [vmem:[%s748 + $0x110] sm:%s741]
                  %777 = vst [vmem:[%s749 + $0x34] sm:%s741] %v776
                  %v778 = vld [vmem:[%s748 + $0x114] sm:%s741]
                  %779 = vst [vmem:[%s749 + $0x38] sm:%s741] %v778
                  %v780 = vld [vmem:[%s748 + $0x118] sm:%s741]
                  %781 = vst [vmem:[%s749 + $0x3c] sm:%s741] %v780
                  %v782 = vld [vmem:[%s748 + $0x11c] sm:%s741]
                  %783 = vst [vmem:[%s749 + $0x40] sm:%s741] %v782
                  %v784 = vld [vmem:[%s748 + $0x120] sm:%s741]
                  %785 = vst [vmem:[%s749 + $0x44] sm:%s741] %v784
                  %v786 = vld [vmem:[%s748 + $0x124] sm:%s741]
                  %787 = vst [vmem:[%s749 + $0x48] sm:%s741] %v786
                  %v788 = vld [vmem:[%s748 + $0x128] sm:%s741]
                  %789 = vst [vmem:[%s749 + $0x4c] sm:%s741] %v788
                  %v790 = vld [vmem:[%s748 + $0x12c] sm:%s741]
                  %791 = vst [vmem:[%s749 + $0x50] sm:%s741] %v790
                  %v792 = vld [vmem:[%s748 + $0x130] sm:%s741]
                  %793 = vst [vmem:[%s749 + $0x54] sm:%s741] %v792
                $region173: #{simple_recog_forward.1} parent=160 // loop_footer
                  %s747 = sadd.s32 1, %s743
                $region174: #{simple_recog_forward.1} parent=160 // loop_footer_branch
                  %742 = sbr.rel target = $region170
                $region175: #{simple_recog_forward.1} parent=160 // loop_exit
                  _
              $region161: #{simple_recog_forward.1} parent=145 // pred_fallthru
                _
            $region146: #{simple_recog_forward.1} parent=141 // pred_fallthru
              _
            // Predicated region
            $region147: #{simple_recog_forward.1} parent=141 // pred_check
              _
            $region148: #{simple_recog_forward.1} parent=141 // pred_check_branch
              %675 = sbr.rel (0) target = $region150
            $region149: #{simple_recog_forward.1} parent=141 // pred_region
              %s677 = ssub.s32 16, 1
              loop: start=0, step=1, limit=1
              $region151: #{simple_recog_forward.1} parent=149 // loop_pre_header
                _
              $region152: #{simple_recog_forward.1} parent=149 // loop_header
                %s679 = sphi 0, %s683
                %p680 = scmp.ge.s32.totalorder %s679, 1
                %s684 = sphi %s669, %s669
                %s685 = sphi %s663, %s663
              $region153: #{simple_recog_forward.1} parent=149 // loop_header_branch
                %682 = sbr.rel (%p680) target = $region157
              $region154: #{simple_recog_forward.1} parent=149 // loop_body
                %v686 = vld [vmem:[%s684] sm:%s677]
                %687 = vst [vmem:[%s685] sm:%s677] %v686
                %v688 = vld [vmem:[%s684 + $0x4] sm:%s677]
                %689 = vst [vmem:[%s685 + $0x4] sm:%s677] %v688
                %v690 = vld [vmem:[%s684 + $0x8] sm:%s677]
                %691 = vst [vmem:[%s685 + $0x8] sm:%s677] %v690
                %v692 = vld [vmem:[%s684 + $0xc] sm:%s677]
                %693 = vst [vmem:[%s685 + $0xc] sm:%s677] %v692
                %v694 = vld [vmem:[%s684 + $0x10] sm:%s677]
                %695 = vst [vmem:[%s685 + $0x10] sm:%s677] %v694
                %v696 = vld [vmem:[%s684 + $0x14] sm:%s677]
                %697 = vst [vmem:[%s685 + $0x14] sm:%s677] %v696
                %v698 = vld [vmem:[%s684 + $0x18] sm:%s677]
                %699 = vst [vmem:[%s685 + $0x18] sm:%s677] %v698
                %v700 = vld [vmem:[%s684 + $0x1c] sm:%s677]
                %701 = vst [vmem:[%s685 + $0x1c] sm:%s677] %v700
                %v702 = vld [vmem:[%s684 + $0x20] sm:%s677]
                %703 = vst [vmem:[%s685 + $0x20] sm:%s677] %v702
                %v704 = vld [vmem:[%s684 + $0x24] sm:%s677]
                %705 = vst [vmem:[%s685 + $0x24] sm:%s677] %v704
                %v706 = vld [vmem:[%s684 + $0x28] sm:%s677]
                %707 = vst [vmem:[%s685 + $0x28] sm:%s677] %v706
                %v708 = vld [vmem:[%s684 + $0x108] sm:%s677]
                %709 = vst [vmem:[%s685 + $0x2c] sm:%s677] %v708
                %v710 = vld [vmem:[%s684 + $0x10c] sm:%s677]
                %711 = vst [vmem:[%s685 + $0x30] sm:%s677] %v710
                %v712 = vld [vmem:[%s684 + $0x110] sm:%s677]
                %713 = vst [vmem:[%s685 + $0x34] sm:%s677] %v712
                %v714 = vld [vmem:[%s684 + $0x114] sm:%s677]
                %715 = vst [vmem:[%s685 + $0x38] sm:%s677] %v714
                %v716 = vld [vmem:[%s684 + $0x118] sm:%s677]
                %717 = vst [vmem:[%s685 + $0x3c] sm:%s677] %v716
                %v718 = vld [vmem:[%s684 + $0x11c] sm:%s677]
                %719 = vst [vmem:[%s685 + $0x40] sm:%s677] %v718
                %v720 = vld [vmem:[%s684 + $0x120] sm:%s677]
                %721 = vst [vmem:[%s685 + $0x44] sm:%s677] %v720
                %v722 = vld [vmem:[%s684 + $0x124] sm:%s677]
                %723 = vst [vmem:[%s685 + $0x48] sm:%s677] %v722
                %v724 = vld [vmem:[%s684 + $0x128] sm:%s677]
                %725 = vst [vmem:[%s685 + $0x4c] sm:%s677] %v724
                %v726 = vld [vmem:[%s684 + $0x12c] sm:%s677]
                %727 = vst [vmem:[%s685 + $0x50] sm:%s677] %v726
                %v728 = vld [vmem:[%s684 + $0x130] sm:%s677]
                %729 = vst [vmem:[%s685 + $0x54] sm:%s677] %v728
              $region155: #{simple_recog_forward.1} parent=149 // loop_footer
                %s683 = sadd.s32 1, %s679
              $region156: #{simple_recog_forward.1} parent=149 // loop_footer_branch
                %678 = sbr.rel target = $region152
              $region157: #{simple_recog_forward.1} parent=149 // loop_exit
                _
            $region150: #{simple_recog_forward.1} parent=141 // pred_fallthru
              _
          $region142: #{simple_recog_forward.1} parent=137 // pred_fallthru
            _
          %794 = vnop
        $region138: #{simple_recog_forward.1} parent=51 // pred_fallthru
          _
      $region52: #{simple_recog_forward.1} parent=5 // pred_fallthru
        _
      %p795 = scmp.le.s32.totalorder 1, %s21
      %p796 = scmp.lt.s32.totalorder %s21, 9
      %p797 = pnand %p795, %p796
      %p798 = pneg %p797
      // Predicated region
      $region176: #{simple_recog_forward.1} parent=5 // pred_check
        _
      $region177: #{simple_recog_forward.1} parent=5 // pred_check_branch
        %800 = sbr.rel (%p797) target = $region179
      $region178: #{simple_recog_forward.1} parent=5 // pred_region
        %s801 = ssub.s32 %s21, 1
        %s802 = sand.u32 %s48, 1
        %s803 = sand.u32 %s48, 1
        %s804 = smul.addr %s803, 88
        %s805 = scalar_lea.vmem [#allocation4], %s804
        // Predicated region
        $region180: #{simple_recog_forward.1} parent=178 // pred_check
          %p806 = pneg %p61
        $region181: #{simple_recog_forward.1} parent=178 // pred_check_branch
          %808 = sbr.rel (%p806) target = $region183
        $region182: #{simple_recog_forward.1} parent=178 // pred_region
          _
        $region183: #{simple_recog_forward.1} parent=178 // pred_fallthru
          _
        %s809 = sand.u32 %s78, 1
        %s810 = sand.u32 %s78, 1
        %s811 = smul.addr %s810, 88
        %s812 = scalar_lea.vmem [#allocation5], %s811
        // Predicated region
        $region184: #{simple_recog_forward.1} parent=178 // pred_check
          %p813 = pneg %p91
        $region185: #{simple_recog_forward.1} parent=178 // pred_check_branch
          %815 = sbr.rel (%p813) target = $region187
        $region186: #{simple_recog_forward.1} parent=178 // pred_region
          _
        $region187: #{simple_recog_forward.1} parent=178 // pred_fallthru
          _
        %s816 = sand.u32 %s108, 1
        %s817 = sand.u32 %s108, 1
        %s818 = smul.addr %s817, 88
        %s819 = scalar_lea.vmem [#allocation6], %s818
        // Predicated region
        $region188: #{simple_recog_forward.1} parent=178 // pred_check
          %p820 = pneg %p121
        $region189: #{simple_recog_forward.1} parent=178 // pred_check_branch
          %822 = sbr.rel (%p820) target = $region191
        $region190: #{simple_recog_forward.1} parent=178 // pred_region
          _
        $region191: #{simple_recog_forward.1} parent=178 // pred_fallthru
          _
        %s823 = sand.u32 %s48, 1
        %s824 = sand.u32 %s48, 1
        %s825 = smul.addr %s824, 88
        %s826 = scalar_lea.vmem [#allocation4], %s825
        %p827 = pneg %p61
        %p828 = pneg %p58
        %s829 = sand.u32 %s78, 1
        %s830 = sand.u32 %s78, 1
        %s831 = smul.addr %s830, 88
        %s832 = scalar_lea.vmem [#allocation5], %s831
        %p833 = pneg %p91
        %p834 = pneg %p88
        %s835 = sand.u32 %s108, 1
        %s836 = sand.u32 %s108, 1
        %s837 = smul.addr %s836, 88
        %s838 = scalar_lea.vmem [#allocation6], %s837
        %p839 = pneg %p121
        %p840 = pneg %p118
        %p841 = pneg %p142
        %p842 = pneg %p139
        %p843 = pneg %p163
        %p844 = pneg %p160
        %p845 = pneg %p184
        %p846 = pneg %p181
        %p847 = pneg %p205
        %p848 = pneg %p202
        %p849 = pneg %p226
        %p850 = pneg %p223
        %p851 = pneg %p247
        %p852 = pneg %p244
        %p853 = pneg %p268
        %p854 = pneg %p265
        %p855 = pneg %p289
        %p856 = pneg %p286
        %p857 = pneg %p310
        %p858 = pneg %p307
        %p859 = pneg %p336
        %p860 = pneg %p333
        %s861 = sand.u32 %s323, 1
        %s862 = scalar_lea.sflag [#allocation8], %s861
        %s863 = sand.u32 %s323, 1
        %s864 = scalar_lea.vmem [#allocation7], %s863
        %s865 = smul.u32 11, %s31
        %s866 = sadd.s32 %s31, 1
        %s867 = smul.u32 11, %s866
        %s868 = sadd.s32 %s31, 2
        %s869 = smul.u32 11, %s868
        %p871 = scmp.eq.s32.totalorder %s31, 0
        // Predicated region
        $region192: #{simple_recog_forward.1} parent=178 // pred_check
          %p872 = pneg %p871
        $region193: #{simple_recog_forward.1} parent=178 // pred_check_branch
          %874 = sbr.rel (%p872) target = $region195
        $region194: #{simple_recog_forward.1} parent=178 // pred_region
          %875 = vst [vmem:[#allocation3] sm:$0x1] 0.0
        $region195: #{simple_recog_forward.1} parent=178 // pred_fallthru
          _
        %v876 = vld [vmem:[%s805] sm:$0xf]
        %v877 = vld [vmem:[%s805 + $0x4] sm:$0xf]
        %v878 = vld [vmem:[%s805 + $0x8] sm:$0xf]
        %v879 = vld [vmem:[%s805 + $0xc] sm:$0xf]
        %v880 = vld [vmem:[%s805 + $0x10] sm:$0xf]
        %v881 = vld [vmem:[%s805 + $0x14] sm:$0xf]
        %v882 = vld [vmem:[%s805 + $0x18] sm:$0xf]
        %v883 = vld [vmem:[%s805 + $0x1c] sm:$0xf]
        %s884 = scalar_lea.vmem %s805, 44 [#allocation4]
        %v885 = vld [vmem:[%s884] sm:$0xf]
        %v886 = vld [vmem:[%s884 + $0x4] sm:$0xf]
        %v887 = vld [vmem:[%s884 + $0x8] sm:$0xf]
        %v888 = vld [vmem:[%s884 + $0xc] sm:$0xf]
        %v889 = vld [vmem:[%s884 + $0x10] sm:$0xf]
        %v890 = vld [vmem:[%s884 + $0x14] sm:$0xf]
        %v891 = vld [vmem:[%s884 + $0x18] sm:$0xf]
        %v892 = vld [vmem:[%s884 + $0x1c] sm:$0xf]
        %v893 = vld [vmem:[%s805 + $0x20] sm:$0xf]
        %v894 = vld [vmem:[%s884 + $0x20] sm:$0xf]
        %v895 = vld [vmem:[%s805 + $0x24] sm:$0xf]
        %v896 = vld [vmem:[%s884 + $0x24] sm:$0xf]
        %v897 = vld [vmem:[%s805 + $0x28] sm:$0xf]
        %v898 = vld [vmem:[%s812] sm:$0xf]
        %v899 = vld [vmem:[%s812 + $0x4] sm:$0xf]
        %v900 = vld [vmem:[%s812 + $0x8] sm:$0xf]
        %v901 = vld [vmem:[%s812 + $0xc] sm:$0xf]
        %v902 = vld [vmem:[%s812 + $0x10] sm:$0xf]
        %v903 = vld [vmem:[%s812 + $0x14] sm:$0xf]
        %v904 = vld [vmem:[%s812 + $0x18] sm:$0xf]
        %v905 = vld [vmem:[%s812 + $0x1c] sm:$0xf]
        %s906 = scalar_lea.vmem %s812, 44 [#allocation5]
        %v907 = vld [vmem:[%s906] sm:$0xf]
        %v908 = vld [vmem:[%s906 + $0x4] sm:$0xf]
        %v909 = vld [vmem:[%s906 + $0x8] sm:$0xf]
        %v910 = vld [vmem:[%s906 + $0xc] sm:$0xf]
        %v911 = vld [vmem:[%s906 + $0x10] sm:$0xf]
        %v912 = vld [vmem:[%s906 + $0x14] sm:$0xf]
        %v913 = vld [vmem:[%s906 + $0x18] sm:$0xf]
        %v914 = vld [vmem:[%s906 + $0x1c] sm:$0xf]
        %v915 = vld [vmem:[%s812 + $0x20] sm:$0xf]
        %v916 = vld [vmem:[%s906 + $0x20] sm:$0xf]
        %v917 = vld [vmem:[%s812 + $0x24] sm:$0xf]
        %v918 = vld [vmem:[%s906 + $0x24] sm:$0xf]
        %v919 = vld [vmem:[%s812 + $0x28] sm:$0xf]
        %v920 = vld [vmem:[%s819] sm:$0xf]
        %v921 = vld [vmem:[%s819 + $0x4] sm:$0xf]
        %v922 = vld [vmem:[%s819 + $0x8] sm:$0xf]
        %v923 = vld [vmem:[%s819 + $0xc] sm:$0xf]
        %v924 = vld [vmem:[%s819 + $0x10] sm:$0xf]
        %v925 = vld [vmem:[%s819 + $0x14] sm:$0xf]
        %v926 = vld [vmem:[%s819 + $0x18] sm:$0xf]
        %v927 = vld [vmem:[%s819 + $0x1c] sm:$0xf]
        %s928 = scalar_lea.vmem %s819, 44 [#allocation6]
        %v929 = vld [vmem:[%s928] sm:$0xf]
        %v930 = vld [vmem:[%s928 + $0x4] sm:$0xf]
        %v931 = vld [vmem:[%s928 + $0x8] sm:$0xf]
        %v932 = vld [vmem:[%s928 + $0xc] sm:$0xf]
        %v933 = vld [vmem:[%s928 + $0x10] sm:$0xf]
        %v934 = vld [vmem:[%s928 + $0x14] sm:$0xf]
        %v935 = vld [vmem:[%s928 + $0x18] sm:$0xf]
        %v936 = vld [vmem:[%s928 + $0x1c] sm:$0xf]
        %v937 = vld [vmem:[%s819 + $0x20] sm:$0xf]
        %v938 = vld [vmem:[%s928 + $0x20] sm:$0xf]
        %v939 = vld [vmem:[%s819 + $0x24] sm:$0xf]
        %v940 = vld [vmem:[%s928 + $0x24] sm:$0xf]
        %v941 = vld [vmem:[%s819 + $0x28] sm:$0xf]
        %v950 = vunpack.c.l.b16 %v876
        %v951 = vunpack.c.l.b16 %v877
        %v952 = vunpack.c.l.b16 %v878
        %v953 = vunpack.c.l.b16 %v879
        %v954 = vunpack.c.l.b16 %v880
        %v955 = vunpack.c.l.b16 %v881
        %v956 = vunpack.c.l.b16 %v882
        %v957 = vunpack.c.l.b16 %v883
        %v958 = vpack.c.b16 %v951, %v950
        %v959 = vpack.c.b16 %v953, %v952
        %v960 = vpack.c.b16 %v955, %v954
        %v961 = vpack.c.b16 %v957, %v956
        %v970 = vunpack.c.l.b16 %v885
        %v971 = vunpack.c.l.b16 %v886
        %v972 = vunpack.c.l.b16 %v887
        %v973 = vunpack.c.l.b16 %v888
        %v974 = vunpack.c.l.b16 %v889
        %v975 = vunpack.c.l.b16 %v890
        %v976 = vunpack.c.l.b16 %v891
        %v977 = vunpack.c.l.b16 %v892
        %v978 = vpack.c.b16 %v971, %v970
        %v979 = vpack.c.b16 %v973, %v972
        %v980 = vpack.c.b16 %v975, %v974
        %v981 = vpack.c.b16 %v977, %v976
        %982 = vrot.lane.b32.xlu0 %v978, 21
        %v983 = vpop.permute.xlu0 %982
        %984 = vrot.lane.b32.xlu0 %v979, 21
        %v985 = vpop.permute.xlu0 %984
        %986 = vrot.lane.b32.xlu0 %v980, 21
        %v987 = vpop.permute.xlu0 %986
        %988 = vrot.lane.b32.xlu0 %v981, 21
        %v989 = vpop.permute.xlu0 %988
        %v991 = vunpack.c.l.b16 %v893
        %v992 = vpack.c.b16 %v952, %v951
        %v993 = vpack.c.b16 %v954, %v953
        %v994 = vpack.c.b16 %v956, %v955
        %v995 = vpack.c.b16 %v991, %v957
        %996 = vrot.lane.b32.xlu0 %v992, 42
        %v997 = vpop.permute.xlu0 %996
        %998 = vrot.lane.b32.xlu0 %v993, 42
        %v999 = vpop.permute.xlu0 %998
        %1000 = vrot.lane.b32.xlu0 %v994, 42
        %v1001 = vpop.permute.xlu0 %1000
        %1002 = vrot.lane.b32.xlu0 %v995, 42
        %v1003 = vpop.permute.xlu0 %1002
        %v1005 = vunpack.c.l.b16 %v894
        %v1006 = vpack.c.b16 %v972, %v971
        %v1007 = vpack.c.b16 %v974, %v973
        %v1008 = vpack.c.b16 %v976, %v975
        %v1009 = vpack.c.b16 %v1005, %v977
        %1010 = vrot.lane.b32.xlu0 %v1006, 63
        %v1011 = vpop.permute.xlu0 %1010
        %1012 = vrot.lane.b32.xlu0 %v1007, 63
        %v1013 = vpop.permute.xlu0 %1012
        %1014 = vrot.lane.b32.xlu0 %v1008, 63
        %v1015 = vpop.permute.xlu0 %1014
        %1016 = vrot.lane.b32.xlu0 %v1009, 63
        %v1017 = vpop.permute.xlu0 %1016
        %v1019 = vunpack.c.l.b16 %v895
        %v1020 = vpack.c.b16 %v1019, %v991
        %1021 = vrot.lane.b32.xlu0 %v959, 84
        %v1022 = vpop.permute.xlu0 %1021
        %1023 = vrot.lane.b32.xlu0 %v960, 84
        %v1024 = vpop.permute.xlu0 %1023
        %1025 = vrot.lane.b32.xlu0 %v961, 84
        %v1026 = vpop.permute.xlu0 %1025
        %1027 = vrot.lane.b32.xlu0 %v1020, 84
        %v1028 = vpop.permute.xlu0 %1027
        %v1030 = vunpack.c.l.b16 %v896
        %v1031 = vpack.c.b16 %v1030, %v1005
        %1032 = vrot.lane.b32.xlu0 %v979, 105
        %v1033 = vpop.permute.xlu0 %1032
        %1034 = vrot.lane.b32.xlu0 %v980, 105
        %v1035 = vpop.permute.xlu0 %1034
        %1036 = vrot.lane.b32.xlu0 %v981, 105
        %v1037 = vpop.permute.xlu0 %1036
        %1038 = vrot.lane.b32.xlu0 %v1031, 105
        %v1039 = vpop.permute.xlu0 %1038
        %v1041 = vunpack.c.l.b16 %v897
        %v1042 = vpack.c.b16 %v1041, %v1019
        %1043 = vrot.lane.b32.xlu0 %v993, 126
        %v1044 = vpop.permute.xlu0 %1043
        %1045 = vrot.lane.b32.xlu0 %v994, 126
        %v1046 = vpop.permute.xlu0 %1045
        %1047 = vrot.lane.b32.xlu0 %v995, 126
        %v1048 = vpop.permute.xlu0 %1047
        %1049 = vrot.lane.b32.xlu0 %v1042, 126
        %v1050 = vpop.permute.xlu0 %1049
        %v1059 = vunpack.c.l.b16 %v898
        %v1060 = vunpack.c.l.b16 %v899
        %v1061 = vunpack.c.l.b16 %v900
        %v1062 = vunpack.c.l.b16 %v901
        %v1063 = vunpack.c.l.b16 %v902
        %v1064 = vunpack.c.l.b16 %v903
        %v1065 = vunpack.c.l.b16 %v904
        %v1066 = vunpack.c.l.b16 %v905
        %v1067 = vpack.c.b16 %v1060, %v1059
        %v1068 = vpack.c.b16 %v1062, %v1061
        %v1069 = vpack.c.b16 %v1064, %v1063
        %v1070 = vpack.c.b16 %v1066, %v1065
        %1071 = vrot.lane.b32.xlu0 %v1067, 19
        %v1072 = vpop.permute.xlu0 %1071
        %1073 = vrot.lane.b32.xlu0 %v1068, 19
        %v1074 = vpop.permute.xlu0 %1073
        %1075 = vrot.lane.b32.xlu0 %v1069, 19
        %v1076 = vpop.permute.xlu0 %1075
        %1077 = vrot.lane.b32.xlu0 %v1070, 19
        %v1078 = vpop.permute.xlu0 %1077
        %v1087 = vunpack.c.l.b16 %v907
        %v1088 = vunpack.c.l.b16 %v908
        %v1089 = vunpack.c.l.b16 %v909
        %v1090 = vunpack.c.l.b16 %v910
        %v1091 = vunpack.c.l.b16 %v911
        %v1092 = vunpack.c.l.b16 %v912
        %v1093 = vunpack.c.l.b16 %v913
        %v1094 = vunpack.c.l.b16 %v914
        %v1095 = vpack.c.b16 %v1088, %v1087
        %v1096 = vpack.c.b16 %v1090, %v1089
        %v1097 = vpack.c.b16 %v1092, %v1091
        %v1098 = vpack.c.b16 %v1094, %v1093
        %1099 = vrot.lane.b32.xlu0 %v1095, 40
        %v1100 = vpop.permute.xlu0 %1099
        %1101 = vrot.lane.b32.xlu0 %v1096, 40
        %v1102 = vpop.permute.xlu0 %1101
        %1103 = vrot.lane.b32.xlu0 %v1097, 40
        %v1104 = vpop.permute.xlu0 %1103
        %1105 = vrot.lane.b32.xlu0 %v1098, 40
        %v1106 = vpop.permute.xlu0 %1105
        %v1108 = vunpack.c.l.b16 %v915
        %v1109 = vpack.c.b16 %v1061, %v1060
        %v1110 = vpack.c.b16 %v1063, %v1062
        %v1111 = vpack.c.b16 %v1065, %v1064
        %v1112 = vpack.c.b16 %v1108, %v1066
        %1113 = vrot.lane.b32.xlu0 %v1109, 61
        %v1114 = vpop.permute.xlu0 %1113
        %1115 = vrot.lane.b32.xlu0 %v1110, 61
        %v1116 = vpop.permute.xlu0 %1115
        %1117 = vrot.lane.b32.xlu0 %v1111, 61
        %v1118 = vpop.permute.xlu0 %1117
        %1119 = vrot.lane.b32.xlu0 %v1112, 61
        %v1120 = vpop.permute.xlu0 %1119
        %v1122 = vunpack.c.l.b16 %v916
        %v1123 = vpack.c.b16 %v1089, %v1088
        %v1124 = vpack.c.b16 %v1091, %v1090
        %v1125 = vpack.c.b16 %v1093, %v1092
        %v1126 = vpack.c.b16 %v1122, %v1094
        %1127 = vrot.lane.b32.xlu0 %v1123, 82
        %v1128 = vpop.permute.xlu0 %1127
        %1129 = vrot.lane.b32.xlu0 %v1124, 82
        %v1130 = vpop.permute.xlu0 %1129
        %1131 = vrot.lane.b32.xlu0 %v1125, 82
        %v1132 = vpop.permute.xlu0 %1131
        %1133 = vrot.lane.b32.xlu0 %v1126, 82
        %v1134 = vpop.permute.xlu0 %1133
        %v1136 = vunpack.c.l.b16 %v917
        %v1137 = vpack.c.b16 %v1136, %v1108
        %1138 = vrot.lane.b32.xlu0 %v1068, 103
        %v1139 = vpop.permute.xlu0 %1138
        %1140 = vrot.lane.b32.xlu0 %v1069, 103
        %v1141 = vpop.permute.xlu0 %1140
        %1142 = vrot.lane.b32.xlu0 %v1070, 103
        %v1143 = vpop.permute.xlu0 %1142
        %1144 = vrot.lane.b32.xlu0 %v1137, 103
        %v1145 = vpop.permute.xlu0 %1144
        %v1147 = vunpack.c.l.b16 %v918
        %v1148 = vpack.c.b16 %v1147, %v1122
        %1149 = vrot.lane.b32.xlu0 %v1096, 124
        %v1150 = vpop.permute.xlu0 %1149
        %1151 = vrot.lane.b32.xlu0 %v1097, 124
        %v1152 = vpop.permute.xlu0 %1151
        %1153 = vrot.lane.b32.xlu0 %v1098, 124
        %v1154 = vpop.permute.xlu0 %1153
        %1155 = vrot.lane.b32.xlu0 %v1148, 124
        %v1156 = vpop.permute.xlu0 %1155
        %v1158 = vunpack.c.l.b16 %v919
        %v1159 = vpack.c.b16 %v1158, %v1136
        %1160 = vrot.lane.b32.xlu0 %v1110, 17
        %v1161 = vpop.permute.xlu0 %1160
        %1162 = vrot.lane.b32.xlu0 %v1111, 17
        %v1163 = vpop.permute.xlu0 %1162
        %1164 = vrot.lane.b32.xlu0 %v1112, 17
        %v1165 = vpop.permute.xlu0 %1164
        %1166 = vrot.lane.b32.xlu0 %v1159, 17
        %v1167 = vpop.permute.xlu0 %1166
        %v1176 = vunpack.c.l.b16 %v920
        %v1177 = vunpack.c.l.b16 %v921
        %v1178 = vunpack.c.l.b16 %v922
        %v1179 = vunpack.c.l.b16 %v923
        %v1180 = vunpack.c.l.b16 %v924
        %v1181 = vunpack.c.l.b16 %v925
        %v1182 = vunpack.c.l.b16 %v926
        %v1183 = vunpack.c.l.b16 %v927
        %v1184 = vpack.c.b16 %v1177, %v1176
        %v1185 = vpack.c.b16 %v1179, %v1178
        %v1186 = vpack.c.b16 %v1181, %v1180
        %v1187 = vpack.c.b16 %v1183, %v1182
        %1188 = vrot.lane.b32.xlu0 %v1184, 38
        %v1189 = vpop.permute.xlu0 %1188
        %1190 = vrot.lane.b32.xlu0 %v1185, 38
        %v1191 = vpop.permute.xlu0 %1190
        %1192 = vrot.lane.b32.xlu0 %v1186, 38
        %v1193 = vpop.permute.xlu0 %1192
        %1194 = vrot.lane.b32.xlu0 %v1187, 38
        %v1195 = vpop.permute.xlu0 %1194
        %v1204 = vunpack.c.l.b16 %v929
        %v1205 = vunpack.c.l.b16 %v930
        %v1206 = vunpack.c.l.b16 %v931
        %v1207 = vunpack.c.l.b16 %v932
        %v1208 = vunpack.c.l.b16 %v933
        %v1209 = vunpack.c.l.b16 %v934
        %v1210 = vunpack.c.l.b16 %v935
        %v1211 = vunpack.c.l.b16 %v936
        %v1212 = vpack.c.b16 %v1205, %v1204
        %v1213 = vpack.c.b16 %v1207, %v1206
        %v1214 = vpack.c.b16 %v1209, %v1208
        %v1215 = vpack.c.b16 %v1211, %v1210
        %1216 = vrot.lane.b32.xlu0 %v1212, 59
        %v1217 = vpop.permute.xlu0 %1216
        %1218 = vrot.lane.b32.xlu0 %v1213, 59
        %v1219 = vpop.permute.xlu0 %1218
        %1220 = vrot.lane.b32.xlu0 %v1214, 59
        %v1221 = vpop.permute.xlu0 %1220
        %1222 = vrot.lane.b32.xlu0 %v1215, 59
        %v1223 = vpop.permute.xlu0 %1222
        %vm1224 = vcmask 171008
        %v1227 = vsel %vm1224, %v958, %v983
        %v1230 = vsel %vm1224, %v959, %v985
        %v1233 = vsel %vm1224, %v960, %v987
        %v1236 = vsel %vm1224, %v961, %v989
        %vm1237 = vcmask 343040
        %v1239 = vsel %vm1237, %v1227, %v997
        %v1241 = vsel %vm1237, %v1230, %v999
        %v1243 = vsel %vm1237, %v1233, %v1001
        %v1245 = vsel %vm1237, %v1236, %v1003
        %vm1246 = vcmask 515072
        %v1248 = vsel %vm1246, %v1239, %v1011
        %v1250 = vsel %vm1246, %v1241, %v1013
        %v1252 = vsel %vm1246, %v1243, %v1015
        %v1254 = vsel %vm1246, %v1245, %v1017
        %vm1255 = vcmask 687104
        %v1257 = vsel %vm1255, %v1248, %v1022
        %v1259 = vsel %vm1255, %v1250, %v1024
        %v1261 = vsel %vm1255, %v1252, %v1026
        %v1263 = vsel %vm1255, %v1254, %v1028
        %vm1264 = vcmask 859136
        %v1266 = vsel %vm1264, %v1257, %v1033
        %v1268 = vsel %vm1264, %v1259, %v1035
        %v1270 = vsel %vm1264, %v1261, %v1037
        %v1272 = vsel %vm1264, %v1263, %v1039
        %vm1273 = vcmask 1031168
        %v1275 = vsel %vm1273, %v1266, %v1044
        %v1278 = vsel %vm1273, %v1268, %v1046
        %v1281 = vsel %vm1273, %v1270, %v1048
        %v1284 = vsel %vm1273, %v1272, %v1050
        %vm1286 = vcmask 154624
        %v1288 = vsel %vm1286, %v1044, %v1072
        %v1290 = vsel %vm1286, %v1046, %v1074
        %v1292 = vsel %vm1286, %v1048, %v1076
        %v1294 = vsel %vm1286, %v1050, %v1078
        %vm1295 = vcmask 326656
        %v1297 = vsel %vm1295, %v1288, %v1100
        %v1299 = vsel %vm1295, %v1290, %v1102
        %v1301 = vsel %vm1295, %v1292, %v1104
        %v1303 = vsel %vm1295, %v1294, %v1106
        %vm1304 = vcmask 498688
        %v1306 = vsel %vm1304, %v1297, %v1114
        %v1308 = vsel %vm1304, %v1299, %v1116
        %v1310 = vsel %vm1304, %v1301, %v1118
        %v1312 = vsel %vm1304, %v1303, %v1120
        %vm1313 = vcmask 670720
        %v1315 = vsel %vm1313, %v1306, %v1128
        %v1317 = vsel %vm1313, %v1308, %v1130
        %v1319 = vsel %vm1313, %v1310, %v1132
        %v1321 = vsel %vm1313, %v1312, %v1134
        %vm1322 = vcmask 842752
        %v1324 = vsel %vm1322, %v1315, %v1139
        %v1326 = vsel %vm1322, %v1317, %v1141
        %v1328 = vsel %vm1322, %v1319, %v1143
        %v1330 = vsel %vm1322, %v1321, %v1145
        %vm1331 = vcmask 1014784
        %v1333 = vsel %vm1331, %v1324, %v1150
        %v1336 = vsel %vm1331, %v1326, %v1152
        %v1339 = vsel %vm1331, %v1328, %v1154
        %v1342 = vsel %vm1331, %v1330, %v1156
        %vm1344 = vcmask 138240
        %v1346 = vsel %vm1344, %v1150, %v1161
        %v1348 = vsel %vm1344, %v1152, %v1163
        %v1350 = vsel %vm1344, %v1154, %v1165
        %v1352 = vsel %vm1344, %v1156, %v1167
        %vm1353 = vcmask 310272
        %v1355 = vsel %vm1353, %v1346, %v1189
        %v1357 = vsel %vm1353, %v1348, %v1191
        %v1359 = vsel %vm1353, %v1350, %v1193
        %v1361 = vsel %vm1353, %v1352, %v1195
        %vm1362 = vcmask 482304
        %v1364 = vsel %vm1362, %v1355, %v1217
        %v1366 = vsel %vm1362, %v1357, %v1219
        %v1368 = vsel %vm1362, %v1359, %v1221
        %v1370 = vsel %vm1362, %v1361, %v1223
        %v1372 = vunpack.c.l.b16 %v937
        %v1373 = vpack.c.b16 %v1178, %v1177
        %v1374 = vpack.c.b16 %v1180, %v1179
        %v1375 = vpack.c.b16 %v1182, %v1181
        %v1376 = vpack.c.b16 %v1372, %v1183
        %v1378 = vunpack.c.l.b16 %v938
        %v1379 = vpack.c.b16 %v1206, %v1205
        %v1380 = vpack.c.b16 %v1208, %v1207
        %v1381 = vpack.c.b16 %v1210, %v1209
        %v1382 = vpack.c.b16 %v1378, %v1211
        %1383 = vrot.lane.b32.xlu0 %v1379, 21
        %v1384 = vpop.permute.xlu0 %1383
        %1385 = vrot.lane.b32.xlu0 %v1380, 21
        %v1386 = vpop.permute.xlu0 %1385
        %1387 = vrot.lane.b32.xlu0 %v1381, 21
        %v1388 = vpop.permute.xlu0 %1387
        %1389 = vrot.lane.b32.xlu0 %v1382, 21
        %v1390 = vpop.permute.xlu0 %1389
        %v1392 = vunpack.c.l.b16 %v939
        %v1393 = vpack.c.b16 %v1392, %v1372
        %1394 = vrot.lane.b32.xlu0 %v1185, 42
        %v1395 = vpop.permute.xlu0 %1394
        %1396 = vrot.lane.b32.xlu0 %v1186, 42
        %v1397 = vpop.permute.xlu0 %1396
        %1398 = vrot.lane.b32.xlu0 %v1187, 42
        %v1399 = vpop.permute.xlu0 %1398
        %1400 = vrot.lane.b32.xlu0 %v1393, 42
        %v1401 = vpop.permute.xlu0 %1400
        %v1403 = vunpack.c.l.b16 %v940
        %v1404 = vpack.c.b16 %v1403, %v1378
        %1405 = vrot.lane.b32.xlu0 %v1213, 63
        %v1406 = vpop.permute.xlu0 %1405
        %1407 = vrot.lane.b32.xlu0 %v1214, 63
        %v1408 = vpop.permute.xlu0 %1407
        %1409 = vrot.lane.b32.xlu0 %v1215, 63
        %v1410 = vpop.permute.xlu0 %1409
        %1411 = vrot.lane.b32.xlu0 %v1404, 63
        %v1412 = vpop.permute.xlu0 %1411
        %v1414 = vunpack.c.l.b16 %v941
        %v1415 = vpack.c.b16 %v1414, %v1392
        %1416 = vrot.lane.b32.xlu0 %v1374, 84
        %v1417 = vpop.permute.xlu0 %1416
        %1418 = vrot.lane.b32.xlu0 %v1375, 84
        %v1419 = vpop.permute.xlu0 %1418
        %1420 = vrot.lane.b32.xlu0 %v1376, 84
        %v1421 = vpop.permute.xlu0 %1420
        %1422 = vrot.lane.b32.xlu0 %v1415, 84
        %v1423 = vpop.permute.xlu0 %1422
        %v1426 = vsel %vm1224, %v1373, %v1384
        %v1429 = vsel %vm1224, %v1374, %v1386
        %v1432 = vsel %vm1224, %v1375, %v1388
        %v1435 = vsel %vm1224, %v1376, %v1390
        %v1437 = vsel %vm1237, %v1426, %v1395
        %v1439 = vsel %vm1237, %v1429, %v1397
        %v1441 = vsel %vm1237, %v1432, %v1399
        %v1443 = vsel %vm1237, %v1435, %v1401
        %v1445 = vsel %vm1246, %v1437, %v1406
        %v1447 = vsel %vm1246, %v1439, %v1408
        %v1449 = vsel %vm1246, %v1441, %v1410
        %v1451 = vsel %vm1246, %v1443, %v1412
        %v1453 = vsel %vm1255, %v1445, %v1417
        %v1455 = vsel %vm1255, %v1447, %v1419
        %v1457 = vsel %vm1255, %v1449, %v1421
        %v1459 = vsel %vm1255, %v1451, %v1423
        %1464 = vrot.lane.b32.xlu0 %v1453, 80
        %v1465 = vpop.permute.xlu0 %1464
        %1466 = vrot.lane.b32.xlu0 %v1455, 80
        %v1467 = vpop.permute.xlu0 %1466
        %1468 = vrot.lane.b32.xlu0 %v1457, 80
        %v1469 = vpop.permute.xlu0 %1468
        %1470 = vrot.lane.b32.xlu0 %v1459, 80
        %v1471 = vpop.permute.xlu0 %1470
        %vm1472 = vcmask 654336
        %v1474 = vsel %vm1472, %v1364, %v1465
        %v1477 = vsel %vm1472, %v1366, %v1467
        %v1480 = vsel %vm1472, %v1368, %v1469
        %v1483 = vsel %vm1472, %v1370, %v1471
        %v1485 = vld [vmem:[%s4] sm:$0xf]
        %v1486 = vld [vmem:[%s4 + $0x4] sm:$0xf]
        %v1487 = vld [vmem:[%s4 + $0x8] sm:$0xf]
        %v1488 = vld [vmem:[%s4 + $0xc] sm:$0xf]
        %v1489 = vld [vmem:[%s4 + $0x10] sm:$0xf]
        %v1490 = vld [vmem:[%s4 + $0x14] sm:$0xf]
        %v1491 = vld [vmem:[%s4 + $0x18] sm:$0xf]
        %v1492 = vld [vmem:[%s4 + $0x1c] sm:$0xf]
        %v1493 = vld [vmem:[%s4 + $0x20] sm:$0xf]
        %v1494 = vld [vmem:[%s4 + $0x24] sm:$0xf]
        %v1495 = vld [vmem:[%s4 + $0x28] sm:$0xf]
        %v1496 = vld [vmem:[%s4 + $0x2c] sm:$0xf]
        %v1497 = vld [vmem:[%s4 + $0x30] sm:$0xf]
        %v1498 = vld [vmem:[%s4 + $0x34] sm:$0xf]
        %v1499 = vld [vmem:[%s4 + $0x38] sm:$0xf]
        %v1500 = vld [vmem:[%s4 + $0x3c] sm:$0xf]
        %v1501 = vld [vmem:[%s4 + $0x40] sm:$0xf]
        %v1502 = vld [vmem:[%s4 + $0x44] sm:$0xf]
        %v1503 = vld [vmem:[%s4 + $0x48] sm:$0xf]
        %v1504 = vld [vmem:[%s4 + $0x4c] sm:$0xf]
        %v1505 = vld [vmem:[%s4 + $0x50] sm:$0xf]
        %v1506 = vld [vmem:[%s4 + $0x54] sm:$0xf]
        %v1507 = vld [vmem:[%s4 + $0x58] sm:$0xf]
        %v1508 = vld [vmem:[%s4 + $0x5c] sm:$0xf]
        %v1509 = vld [vmem:[%s4 + $0x60] sm:$0xf]
        %v1510 = vld [vmem:[%s4 + $0x64] sm:$0xf]
        %v1511 = vld [vmem:[%s4 + $0x68] sm:$0xf]
        %v1512 = vld [vmem:[%s4 + $0x6c] sm:$0xf]
        %v1513 = vld [vmem:[%s4 + $0x70] sm:$0xf]
        %v1514 = vld [vmem:[%s4 + $0x74] sm:$0xf]
        %v1515 = vld [vmem:[%s4 + $0x78] sm:$0xf]
        %v1516 = vld [vmem:[%s4 + $0x7c] sm:$0xf]
        %v1517 = vld [vmem:[%s4 + $0x80] sm:$0xf]
        %v1518 = vld [vmem:[%s4 + $0x84] sm:$0xf]
        %v1519 = vld [vmem:[%s4 + $0x88] sm:$0xf]
        %v1520 = vld [vmem:[%s4 + $0x8c] sm:$0xf]
        %v1521 = vld [vmem:[%s4 + $0x90] sm:$0xf]
        %v1522 = vld [vmem:[%s4 + $0x94] sm:$0xf]
        %v1523 = vld [vmem:[%s4 + $0x98] sm:$0xf]
        %v1524 = vld [vmem:[%s4 + $0x9c] sm:$0xf]
        %v1525 = vld [vmem:[%s4 + $0xa0] sm:$0xf]
        %v1526 = vld [vmem:[%s4 + $0xa4] sm:$0xf]
        %v1527 = vld [vmem:[%s4 + $0xa8] sm:$0xf]
        %v1528 = vld [vmem:[%s4 + $0xac] sm:$0xf]
        %v1529 = vld [vmem:[%s4 + $0xb0] sm:$0xf]
        %v1530 = vld [vmem:[%s4 + $0xb4] sm:$0xf]
        %v1531 = vld [vmem:[%s4 + $0xb8] sm:$0xf]
        %v1532 = vld [vmem:[%s4 + $0xbc] sm:$0xf]
        %v1533 = vld [vmem:[%s4 + $0xc0] sm:$0xf]
        %v1534 = vld [vmem:[%s4 + $0xc4] sm:$0xf]
        %v1535 = vld [vmem:[%s4 + $0xc8] sm:$0xf]
        %v1536 = vld [vmem:[%s4 + $0xcc] sm:$0xf]
        %v1537 = vld [vmem:[%s4 + $0xd0] sm:$0xf]
        %v1538 = vld [vmem:[%s4 + $0xd4] sm:$0xf]
        %v1539 = vld [vmem:[%s4 + $0xd8] sm:$0xf]
        %v1540 = vld [vmem:[%s4 + $0xdc] sm:$0x1]
        %v1597 = vunpack.c.l.b16 %v1485
        %v1598 = vunpack.c.l.b16 %v1486
        %v1599 = vunpack.c.l.b16 %v1487
        %v1600 = vunpack.c.l.b16 %v1488
        %v1601 = vunpack.c.l.b16 %v1489
        %v1602 = vunpack.c.l.b16 %v1490
        %v1603 = vunpack.c.l.b16 %v1491
        %v1604 = vunpack.c.l.b16 %v1492
        %v1605 = vunpack.c.l.b16 %v1493
        %v1606 = vunpack.c.l.b16 %v1494
        %v1607 = vunpack.c.l.b16 %v1495
        %v1608 = vunpack.c.l.b16 %v1496
        %v1609 = vunpack.c.l.b16 %v1497
        %v1610 = vunpack.c.l.b16 %v1498
        %v1611 = vunpack.c.l.b16 %v1499
        %v1612 = vunpack.c.l.b16 %v1500
        %v1613 = vunpack.c.l.b16 %v1501
        %v1614 = vunpack.c.l.b16 %v1502
        %v1615 = vunpack.c.l.b16 %v1503
        %v1616 = vunpack.c.l.b16 %v1504
        %v1617 = vunpack.c.l.b16 %v1505
        %v1618 = vunpack.c.l.b16 %v1506
        %v1619 = vunpack.c.l.b16 %v1507
        %v1620 = vunpack.c.l.b16 %v1508
        %v1621 = vunpack.c.l.b16 %v1509
        %v1622 = vunpack.c.l.b16 %v1510
        %v1623 = vunpack.c.l.b16 %v1511
        %v1624 = vunpack.c.l.b16 %v1512
        %v1625 = vunpack.c.l.b16 %v1513
        %v1626 = vunpack.c.l.b16 %v1514
        %v1627 = vunpack.c.l.b16 %v1515
        %v1628 = vunpack.c.l.b16 %v1516
        %v1629 = vunpack.c.l.b16 %v1517
        %v1630 = vunpack.c.l.b16 %v1518
        %v1631 = vunpack.c.l.b16 %v1519
        %v1632 = vunpack.c.l.b16 %v1520
        %v1633 = vunpack.c.l.b16 %v1521
        %v1634 = vunpack.c.l.b16 %v1522
        %v1635 = vunpack.c.l.b16 %v1523
        %v1636 = vunpack.c.l.b16 %v1524
        %v1637 = vunpack.c.l.b16 %v1525
        %v1638 = vunpack.c.l.b16 %v1526
        %v1639 = vunpack.c.l.b16 %v1527
        %v1640 = vunpack.c.l.b16 %v1528
        %v1641 = vunpack.c.l.b16 %v1529
        %v1642 = vunpack.c.l.b16 %v1530
        %v1643 = vunpack.c.l.b16 %v1531
        %v1644 = vunpack.c.l.b16 %v1532
        %v1645 = vunpack.c.l.b16 %v1533
        %v1646 = vunpack.c.l.b16 %v1534
        %v1647 = vunpack.c.l.b16 %v1535
        %v1648 = vunpack.c.l.b16 %v1536
        %v1649 = vunpack.c.l.b16 %v1537
        %v1650 = vunpack.c.l.b16 %v1538
        %v1651 = vunpack.c.l.b16 %v1539
        %v1652 = vunpack.c.l.b16 %v1540
        %v1653 = vpack.c.b16 %v1598, %v1597
        %v1654 = vpack.c.b16 %v1600, %v1599
        %v1655 = vpack.c.b16 %v1602, %v1601
        %v1656 = vpack.c.b16 %v1604, %v1603
        %v1657 = vpack.c.b16 %v1606, %v1605
        %v1658 = vpack.c.b16 %v1608, %v1607
        %v1659 = vpack.c.b16 %v1610, %v1609
        %v1660 = vpack.c.b16 %v1612, %v1611
        %v1661 = vpack.c.b16 %v1614, %v1613
        %v1662 = vpack.c.b16 %v1616, %v1615
        %v1663 = vpack.c.b16 %v1618, %v1617
        %v1664 = vpack.c.b16 %v1620, %v1619
        %v1665 = vpack.c.b16 %v1622, %v1621
        %v1666 = vpack.c.b16 %v1624, %v1623
        %v1667 = vpack.c.b16 %v1626, %v1625
        %v1668 = vpack.c.b16 %v1628, %v1627
        %v1669 = vpack.c.b16 %v1630, %v1629
        %v1670 = vpack.c.b16 %v1632, %v1631
        %v1671 = vpack.c.b16 %v1634, %v1633
        %v1672 = vpack.c.b16 %v1636, %v1635
        %v1673 = vpack.c.b16 %v1638, %v1637
        %v1674 = vpack.c.b16 %v1640, %v1639
        %v1675 = vpack.c.b16 %v1642, %v1641
        %v1676 = vpack.c.b16 %v1644, %v1643
        %v1677 = vpack.c.b16 %v1646, %v1645
        %v1678 = vpack.c.b16 %v1648, %v1647
        %v1679 = vpack.c.b16 %v1650, %v1649
        %v1680 = vpack.c.b16 %v1652, %v1651
        %vm1708 = vcmask 465920
        %v1709 = vsel %vm1708, %v1465, 0
        %v1711 = vsel %vm1708, %v1467, 0
        %v1713 = vsel %vm1708, %v1469, 0
        %v1715 = vsel %vm1708, %v1471, 0
        %vm1717 = vcmask 1043456
        %vm1718 = vcmask 1044480
        %v1719 = vsel %vm1717, 4294967295, 65535
        %v1720 = vsel %vm1718, %v1719, 0
        %v1722 = vand.u32 %v1680, %v1720
        %1724 = vmatpush.bf16.msra.mxu0 %v1660
        %1725 = vmatpush.bf16.msra.mxu0 %v1659
        %1726 = vmatpush.bf16.msra.mxu0 %v1658
        %1727 = vmatpush.bf16.msra.mxu0 %v1657
        %1728 = vmatpush.bf16.msra.mxu0 %v1656
        %1729 = vmatpush.bf16.msra.mxu0 %v1655
        %1730 = vmatpush.bf16.msra.mxu0 %v1654
        %1731 = vmatpush.bf16.msra.mxu0 %v1653
        %1732 = vmatmul.bf16.gmra.mxu0 %v1275
        %v1733 = vpop.f32.mrf.mxu0
        %v1734 = vadd.f32 0.0, %v1733
        %v1735 = vpop.f32.mrf.mxu0
        %v1736 = vadd.f32 0.0, %v1735
        %1737 = vmatmul.bf16.gmra.mxu0 %v1278
        %v1738 = vpop.f32.mrf.mxu0
        %v1739 = vadd.f32 0.0, %v1738
        %v1740 = vpop.f32.mrf.mxu0
        %v1741 = vadd.f32 0.0, %v1740
        %1742 = vmatmul.bf16.gmra.mxu0 %v1281
        %v1743 = vpop.f32.mrf.mxu0
        %v1744 = vadd.f32 0.0, %v1743
        %v1745 = vpop.f32.mrf.mxu0
        %v1746 = vadd.f32 0.0, %v1745
        %1747 = vmatmul.bf16.gmra.mxu0 %v1284
        %v1748 = vpop.f32.mrf.mxu0
        %v1749 = vadd.f32 0.0, %v1748
        %v1750 = vpop.f32.mrf.mxu0
        %v1751 = vadd.f32 0.0, %v1750
        %1752 = vdwg.mxu0
        %1753 = vmatpush.bf16.msra.mxu0 %v1668
        %1754 = vmatpush.bf16.msra.mxu0 %v1667
        %1755 = vmatpush.bf16.msra.mxu0 %v1666
        %1756 = vmatpush.bf16.msra.mxu0 %v1665
        %1757 = vmatpush.bf16.msra.mxu0 %v1664
        %1758 = vmatpush.bf16.msra.mxu0 %v1663
        %1759 = vmatpush.bf16.msra.mxu0 %v1662
        %1760 = vmatpush.bf16.msra.mxu0 %v1661
        %1761 = vmatmul.bf16.gmra.mxu0 %v1333
        %v1762 = vpop.f32.mrf.mxu0
        %v1763 = vadd.f32 %v1734, %v1762
        %v1764 = vpop.f32.mrf.mxu0
        %v1765 = vadd.f32 %v1736, %v1764
        %1766 = vmatmul.bf16.gmra.mxu0 %v1336
        %v1767 = vpop.f32.mrf.mxu0
        %v1768 = vadd.f32 %v1739, %v1767
        %v1769 = vpop.f32.mrf.mxu0
        %v1770 = vadd.f32 %v1741, %v1769
        %1771 = vmatmul.bf16.gmra.mxu0 %v1339
        %v1772 = vpop.f32.mrf.mxu0
        %v1773 = vadd.f32 %v1744, %v1772
        %v1774 = vpop.f32.mrf.mxu0
        %v1775 = vadd.f32 %v1746, %v1774
        %1776 = vmatmul.bf16.gmra.mxu0 %v1342
        %v1777 = vpop.f32.mrf.mxu0
        %v1778 = vadd.f32 %v1749, %v1777
        %v1779 = vpop.f32.mrf.mxu0
        %v1780 = vadd.f32 %v1751, %v1779
        %1781 = vdwg.mxu0
        %1782 = vmatpush.bf16.msra.mxu0 %v1676
        %1783 = vmatpush.bf16.msra.mxu0 %v1675
        %1784 = vmatpush.bf16.msra.mxu0 %v1674
        %1785 = vmatpush.bf16.msra.mxu0 %v1673
        %1786 = vmatpush.bf16.msra.mxu0 %v1672
        %1787 = vmatpush.bf16.msra.mxu0 %v1671
        %1788 = vmatpush.bf16.msra.mxu0 %v1670
        %1789 = vmatpush.bf16.msra.mxu0 %v1669
        %1790 = vmatmul.bf16.gmra.mxu0 %v1474
        %v1791 = vpop.f32.mrf.mxu0
        %v1792 = vadd.f32 %v1763, %v1791
        %v1793 = vpop.f32.mrf.mxu0
        %v1794 = vadd.f32 %v1765, %v1793
        %1795 = vmatmul.bf16.gmra.mxu0 %v1477
        %v1796 = vpop.f32.mrf.mxu0
        %v1797 = vadd.f32 %v1768, %v1796
        %v1798 = vpop.f32.mrf.mxu0
        %v1799 = vadd.f32 %v1770, %v1798
        %1800 = vmatmul.bf16.gmra.mxu0 %v1480
        %v1801 = vpop.f32.mrf.mxu0
        %v1802 = vadd.f32 %v1773, %v1801
        %v1803 = vpop.f32.mrf.mxu0
        %v1804 = vadd.f32 %v1775, %v1803
        %1805 = vmatmul.bf16.gmra.mxu0 %v1483
        %v1806 = vpop.f32.mrf.mxu0
        %v1807 = vadd.f32 %v1778, %v1806
        %v1808 = vpop.f32.mrf.mxu0
        %v1809 = vadd.f32 %v1780, %v1808
        %1810 = vdwg.mxu0
        %1811 = vmatpush.bf16.msra.mxu0 0
        %1812 = vmatpush.bf16.msra.mxu0 0
        %1813 = vmatpush.bf16.msra.mxu0 0
        %1814 = vmatpush.bf16.msra.mxu0 0
        %1815 = vmatpush.bf16.msra.mxu0 %v1722
        %1816 = vmatpush.bf16.msra.mxu0 %v1679
        %1817 = vmatpush.bf16.msra.mxu0 %v1678
        %1818 = vmatpush.bf16.msra.mxu0 %v1677
        %1819 = vmatmul.bf16.gmra.mxu0 %v1709
        %v1820 = vpop.f32.mrf.mxu0
        %v1821 = vadd.f32 %v1792, %v1820
        %v1822 = vpop.f32.mrf.mxu0
        %v1823 = vadd.f32 %v1794, %v1822
        %1824 = vmatmul.bf16.gmra.mxu0 %v1711
        %v1825 = vpop.f32.mrf.mxu0
        %v1826 = vadd.f32 %v1797, %v1825
        %v1827 = vpop.f32.mrf.mxu0
        %v1828 = vadd.f32 %v1799, %v1827
        %1829 = vmatmul.bf16.gmra.mxu0 %v1713
        %v1830 = vpop.f32.mrf.mxu0
        %v1831 = vadd.f32 %v1802, %v1830
        %v1832 = vpop.f32.mrf.mxu0
        %v1833 = vadd.f32 %v1804, %v1832
        %1834 = vmatmul.bf16.gmra.mxu0 %v1715
        %v1835 = vpop.f32.mrf.mxu0
        %v1836 = vadd.f32 %v1807, %v1835
        %v1837 = vpop.f32.mrf.mxu0
        %v1838 = vadd.f32 %v1809, %v1837
        %1839 = vdwg.mxu0
        %v1840 = vld [vmem:[%s5] sm:$0x1]
        %v1842 = vperm.slane %v1840, 0
        %v1844 = vmul.f32 %v1821, %v1842
        %v1845 = vmul.f32 %v1823, %v1842
        %v1846 = vmul.f32 %v1826, %v1842
        %v1847 = vmul.f32 %v1828, %v1842
        %v1848 = vmul.f32 %v1831, %v1842
        %v1849 = vmul.f32 %v1833, %v1842
        %v1850 = vmul.f32 %v1836, %v1842
        %v1851 = vmul.f32 %v1838, %v1842
        %v1852 = vld [vmem:[%s6] sm:$0x1]
        %v1854 = vperm.slane %v1852, 0
        %v1856 = vadd.f32 %v1844, %v1854
        %v1857 = vadd.f32 %v1845, %v1854
        %v1858 = vadd.f32 %v1846, %v1854
        %v1859 = vadd.f32 %v1847, %v1854
        %v1860 = vadd.f32 %v1848, %v1854
        %v1861 = vadd.f32 %v1849, %v1854
        %v1862 = vadd.f32 %v1850, %v1854
        %v1863 = vadd.f32 %v1851, %v1854
        %v1864 = vmax.f32 %v1856, 0.0
        %v1865 = vmax.f32 %v1857, 0.0
        %v1866 = vmax.f32 %v1858, 0.0
        %v1867 = vmax.f32 %v1859, 0.0
        %v1868 = vmax.f32 %v1860, 0.0
        %v1869 = vmax.f32 %v1861, 0.0
        %v1870 = vmax.f32 %v1862, 0.0
        %v1871 = vmax.f32 %v1863, 0.0
        %vm1872 = vcmask 523264
        %1873 = vst.msk [vmem:[#allocation2] sm:$0xff] %vm1872, 0.0
        %vm1874 = vcmask 517120
        %1875 = vst.msk [vmem:[#allocation2 + $0x8] sm:$0x3] %vm1874, 0.0
        %1876 = vst.msk [vmem:[#allocation2 + $0x10] sm:$0xff] %vm1872, 0.0
        %1877 = vst.msk [vmem:[#allocation2 + $0x18] sm:$0x3] %vm1874, 0.0
        %1878 = vst.msk [vmem:[#allocation2 + $0x20] sm:$0xff] %vm1872, 0.0
        %1879 = vst.msk [vmem:[#allocation2 + $0x28] sm:$0x3] %vm1874, 0.0
        %1880 = vst.msk [vmem:[#allocation2 + $0x30] sm:$0xff] %vm1872, 0.0
        %1881 = vst.msk [vmem:[#allocation2 + $0x38] sm:$0x3] %vm1874, 0.0
        %1882 = vst.msk [vmem:[#allocation2 + $0x40] sm:$0xff] %vm1872, 0.0
        %1883 = vst.msk [vmem:[#allocation2 + $0x48] sm:$0x3] %vm1874, 0.0
        %1884 = vst.msk [vmem:[#allocation2 + $0x50] sm:$0xff] %vm1872, 0.0
        %1885 = vst.msk [vmem:[#allocation2 + $0x58] sm:$0x3] %vm1874, 0.0
        %1886 = vst.msk [vmem:[#allocation2 + $0x60] sm:$0xff] %vm1872, 0.0
        %1887 = vst.msk [vmem:[#allocation2 + $0x68] sm:$0x3] %vm1874, 0.0
        %1888 = vst.msk [vmem:[#allocation2 + $0x70] sm:$0xff] %vm1872, 0.0
        %1889 = vst.msk [vmem:[#allocation2 + $0x78] sm:$0x3] %vm1874, 0.0
        %1890 = vst.msk [vmem:[#allocation2 + $0x80] sm:$0xff] %vm1872, 0.0
        %1891 = vst.msk [vmem:[#allocation2 + $0x88] sm:$0x3] %vm1874, 0.0
        %1892 = vst.msk [vmem:[#allocation2 + $0x90] sm:$0xff] %vm1872, 0.0
        %1893 = vst.msk [vmem:[#allocation2 + $0x98] sm:$0x3] %vm1874, 0.0
        %s1894 = scalar_lea.vmem [#allocation2], 16
        %1895 = vst.msk [vmem:[%s1894 + $0x1] sm:$0xff] %vm1872, %v1864
        %1896 = vst.msk [vmem:[%s1894 + $0x11] sm:$0xff] %vm1872, %v1865
        %1897 = vst.msk [vmem:[%s1894 + $0x21] sm:$0xff] %vm1872, %v1866
        %1898 = vst.msk [vmem:[%s1894 + $0x31] sm:$0xff] %vm1872, %v1867
        %1899 = vst.msk [vmem:[%s1894 + $0x41] sm:$0xff] %vm1872, %v1868
        %1900 = vst.msk [vmem:[%s1894 + $0x51] sm:$0xff] %vm1872, %v1869
        %1901 = vst.msk [vmem:[%s1894 + $0x61] sm:$0xff] %vm1872, %v1870
        %1902 = vst.msk [vmem:[%s1894 + $0x71] sm:$0xff] %vm1872, %v1871
        %v1903 = vld [vmem:[#allocation2] sm:$0xff]
        %v1904 = vld [vmem:[#allocation2 + $0x10] sm:$0xff]
        %v1905 = vld [vmem:[#allocation2 + $0x20] sm:$0xff]
        %v1906 = vld [vmem:[#allocation2 + $0x30] sm:$0xff]
        %v1907 = vld [vmem:[#allocation2 + $0x40] sm:$0xff]
        %v1908 = vld [vmem:[#allocation2 + $0x50] sm:$0xff]
        %v1909 = vld [vmem:[#allocation2 + $0x60] sm:$0xff]
        %v1910 = vld [vmem:[#allocation2 + $0x70] sm:$0xff]
        %v1911 = vld [vmem:[#allocation2 + $0x1] sm:$0xff]
        %v1912 = vld [vmem:[#allocation2 + $0x11] sm:$0xff]
        %v1913 = vld [vmem:[#allocation2 + $0x21] sm:$0xff]
        %v1914 = vld [vmem:[#allocation2 + $0x31] sm:$0xff]
        %v1915 = vld [vmem:[#allocation2 + $0x41] sm:$0xff]
        %v1916 = vld [vmem:[#allocation2 + $0x51] sm:$0xff]
        %v1917 = vld [vmem:[#allocation2 + $0x61] sm:$0xff]
        %v1918 = vld [vmem:[#allocation2 + $0x71] sm:$0xff]
        %v1919 = vmax.f32 %v1903, %v1911
        %v1920 = vmax.f32 %v1904, %v1912
        %v1921 = vmax.f32 %v1905, %v1913
        %v1922 = vmax.f32 %v1906, %v1914
        %v1923 = vmax.f32 %v1907, %v1915
        %v1924 = vmax.f32 %v1908, %v1916
        %v1925 = vmax.f32 %v1909, %v1917
        %v1926 = vmax.f32 %v1910, %v1918
        %v1927 = vld [vmem:[#allocation2 + $0x2] sm:$0xff]
        %v1928 = vld [vmem:[#allocation2 + $0x12] sm:$0xff]
        %v1929 = vld [vmem:[#allocation2 + $0x22] sm:$0xff]
        %v1930 = vld [vmem:[#allocation2 + $0x32] sm:$0xff]
        %v1931 = vld [vmem:[#allocation2 + $0x42] sm:$0xff]
        %v1932 = vld [vmem:[#allocation2 + $0x52] sm:$0xff]
        %v1933 = vld [vmem:[#allocation2 + $0x62] sm:$0xff]
        %v1934 = vld [vmem:[#allocation2 + $0x72] sm:$0xff]
        %v1935 = vmax.f32 %v1919, %v1927
        %v1936 = vmax.f32 %v1920, %v1928
        %v1937 = vmax.f32 %v1921, %v1929
        %v1938 = vmax.f32 %v1922, %v1930
        %v1939 = vmax.f32 %v1923, %v1931
        %v1940 = vmax.f32 %v1924, %v1932
        %v1941 = vmax.f32 %v1925, %v1933
        %v1942 = vmax.f32 %v1926, %v1934
        %v1943 = vld [vmem:[%s1894] sm:$0xff]
        %v1944 = vld [vmem:[%s1894 + $0x10] sm:$0xff]
        %v1945 = vld [vmem:[%s1894 + $0x20] sm:$0xff]
        %v1946 = vld [vmem:[%s1894 + $0x30] sm:$0xff]
        %v1947 = vld [vmem:[%s1894 + $0x40] sm:$0xff]
        %v1948 = vld [vmem:[%s1894 + $0x50] sm:$0xff]
        %v1949 = vld [vmem:[%s1894 + $0x60] sm:$0xff]
        %v1950 = vld [vmem:[%s1894 + $0x70] sm:$0xff]
        %v1951 = vmax.f32 %v1935, %v1943
        %v1952 = vmax.f32 %v1936, %v1944
        %v1953 = vmax.f32 %v1937, %v1945
        %v1954 = vmax.f32 %v1938, %v1946
        %v1955 = vmax.f32 %v1939, %v1947
        %v1956 = vmax.f32 %v1940, %v1948
        %v1957 = vmax.f32 %v1941, %v1949
        %v1958 = vmax.f32 %v1942, %v1950
        %v1959 = vld [vmem:[%s1894 + $0x1] sm:$0xff]
        %v1960 = vld [vmem:[%s1894 + $0x11] sm:$0xff]
        %v1961 = vld [vmem:[%s1894 + $0x21] sm:$0xff]
        %v1962 = vld [vmem:[%s1894 + $0x31] sm:$0xff]
        %v1963 = vld [vmem:[%s1894 + $0x41] sm:$0xff]
        %v1964 = vld [vmem:[%s1894 + $0x51] sm:$0xff]
        %v1965 = vld [vmem:[%s1894 + $0x61] sm:$0xff]
        %v1966 = vld [vmem:[%s1894 + $0x71] sm:$0xff]
        %v1967 = vmax.f32 %v1951, %v1959
        %v1968 = vmax.f32 %v1952, %v1960
        %v1969 = vmax.f32 %v1953, %v1961
        %v1970 = vmax.f32 %v1954, %v1962
        %v1971 = vmax.f32 %v1955, %v1963
        %v1972 = vmax.f32 %v1956, %v1964
        %v1973 = vmax.f32 %v1957, %v1965
        %v1974 = vmax.f32 %v1958, %v1966
        %v1975 = vld [vmem:[%s1894 + $0x2] sm:$0xff]
        %v1976 = vld [vmem:[%s1894 + $0x12] sm:$0xff]
        %v1977 = vld [vmem:[%s1894 + $0x22] sm:$0xff]
        %v1978 = vld [vmem:[%s1894 + $0x32] sm:$0xff]
        %v1979 = vld [vmem:[%s1894 + $0x42] sm:$0xff]
        %v1980 = vld [vmem:[%s1894 + $0x52] sm:$0xff]
        %v1981 = vld [vmem:[%s1894 + $0x62] sm:$0xff]
        %v1982 = vld [vmem:[%s1894 + $0x72] sm:$0xff]
        %v1983 = vmax.f32 %v1967, %v1975
        %v1984 = vmax.f32 %v1968, %v1976
        %v1985 = vmax.f32 %v1969, %v1977
        %v1986 = vmax.f32 %v1970, %v1978
        %v1987 = vmax.f32 %v1971, %v1979
        %v1988 = vmax.f32 %v1972, %v1980
        %v1989 = vmax.f32 %v1973, %v1981
        %v1990 = vmax.f32 %v1974, %v1982
        %s1991 = scalar_lea.vmem [#allocation2], 32
        %v1992 = vld [vmem:[%s1991] sm:$0xff]
        %v1993 = vld [vmem:[%s1991 + $0x10] sm:$0xff]
        %v1994 = vld [vmem:[%s1991 + $0x20] sm:$0xff]
        %v1995 = vld [vmem:[%s1991 + $0x30] sm:$0xff]
        %v1996 = vld [vmem:[%s1991 + $0x40] sm:$0xff]
        %v1997 = vld [vmem:[%s1991 + $0x50] sm:$0xff]
        %v1998 = vld [vmem:[%s1991 + $0x60] sm:$0xff]
        %v1999 = vld [vmem:[%s1991 + $0x70] sm:$0xff]
        %v2000 = vmax.f32 %v1983, %v1992
        %v2001 = vmax.f32 %v1984, %v1993
        %v2002 = vmax.f32 %v1985, %v1994
        %v2003 = vmax.f32 %v1986, %v1995
        %v2004 = vmax.f32 %v1987, %v1996
        %v2005 = vmax.f32 %v1988, %v1997
        %v2006 = vmax.f32 %v1989, %v1998
        %v2007 = vmax.f32 %v1990, %v1999
        %v2008 = vld [vmem:[%s1991 + $0x1] sm:$0xff]
        %v2009 = vld [vmem:[%s1991 + $0x11] sm:$0xff]
        %v2010 = vld [vmem:[%s1991 + $0x21] sm:$0xff]
        %v2011 = vld [vmem:[%s1991 + $0x31] sm:$0xff]
        %v2012 = vld [vmem:[%s1991 + $0x41] sm:$0xff]
        %v2013 = vld [vmem:[%s1991 + $0x51] sm:$0xff]
        %v2014 = vld [vmem:[%s1991 + $0x61] sm:$0xff]
        %v2015 = vld [vmem:[%s1991 + $0x71] sm:$0xff]
        %v2016 = vmax.f32 %v2000, %v2008
        %v2017 = vmax.f32 %v2001, %v2009
        %v2018 = vmax.f32 %v2002, %v2010
        %v2019 = vmax.f32 %v2003, %v2011
        %v2020 = vmax.f32 %v2004, %v2012
        %v2021 = vmax.f32 %v2005, %v2013
        %v2022 = vmax.f32 %v2006, %v2014
        %v2023 = vmax.f32 %v2007, %v2015
        %v2024 = vld [vmem:[%s1991 + $0x2] sm:$0xff]
        %v2025 = vld [vmem:[%s1991 + $0x12] sm:$0xff]
        %v2026 = vld [vmem:[%s1991 + $0x22] sm:$0xff]
        %v2027 = vld [vmem:[%s1991 + $0x32] sm:$0xff]
        %v2028 = vld [vmem:[%s1991 + $0x42] sm:$0xff]
        %v2029 = vld [vmem:[%s1991 + $0x52] sm:$0xff]
        %v2030 = vld [vmem:[%s1991 + $0x62] sm:$0xff]
        %v2031 = vld [vmem:[%s1991 + $0x72] sm:$0xff]
        %v2032 = vmax.f32 %v2016, %v2024
        %v2033 = vmax.f32 %v2017, %v2025
        %v2034 = vmax.f32 %v2018, %v2026
        %v2035 = vmax.f32 %v2019, %v2027
        %v2036 = vmax.f32 %v2020, %v2028
        %v2037 = vmax.f32 %v2021, %v2029
        %v2038 = vmax.f32 %v2022, %v2030
        %v2039 = vmax.f32 %v2023, %v2031
        %v2040 = vpack.c.bf16 %v2033, %v2032
        %v2041 = vpack.c.bf16 %v2035, %v2034
        %v2042 = vpack.c.bf16 %v2037, %v2036
        %v2043 = vpack.c.bf16 %v2039, %v2038
        %v2044 = vld [vmem:[%s7] sm:$0xf]
        %v2045 = vld [vmem:[%s7 + $0x4] sm:$0xf]
        %v2046 = vld [vmem:[%s7 + $0x8] sm:$0xf]
        %v2047 = vld [vmem:[%s7 + $0xc] sm:$0xf]
        %v2048 = vld [vmem:[%s7 + $0x10] sm:$0xf]
        %v2049 = vld [vmem:[%s7 + $0x14] sm:$0xf]
        %v2050 = vld [vmem:[%s7 + $0x18] sm:$0xf]
        %v2051 = vld [vmem:[%s7 + $0x1c] sm:$0xf]
        %v2060 = vunpack.c.l.b16 %v2044
        %v2061 = vunpack.c.l.b16 %v2045
        %v2062 = vunpack.c.l.b16 %v2046
        %v2063 = vunpack.c.l.b16 %v2047
        %v2064 = vunpack.c.l.b16 %v2048
        %v2065 = vunpack.c.l.b16 %v2049
        %v2066 = vunpack.c.l.b16 %v2050
        %v2067 = vunpack.c.l.b16 %v2051
        %v2068 = vpack.c.b16 %v2061, %v2060
        %v2069 = vpack.c.b16 %v2063, %v2062
        %v2070 = vpack.c.b16 %v2065, %v2064
        %v2071 = vpack.c.b16 %v2067, %v2066
        %v2077 = vsel %vm1872, %v2040, 0
        %v2080 = vsel %vm1872, %v2041, 0
        %v2083 = vsel %vm1872, %v2042, 0
        %v2086 = vsel %vm1872, %v2043, 0
        %2088 = vmatpush.bf16.msra.mxu0 0
        %2089 = vmatpush.bf16.msra.mxu0 0
        %2090 = vmatpush.bf16.msra.mxu0 0
        %2091 = vmatpush.bf16.msra.mxu0 0
        %2092 = vmatpush.bf16.msra.mxu0 %v2071
        %2093 = vmatpush.bf16.msra.mxu0 %v2070
        %2094 = vmatpush.bf16.msra.mxu0 %v2069
        %2095 = vmatpush.bf16.msra.mxu0 %v2068
        %2096 = vmatmul.bf16.gmra.mxu0 %v2077
        %v2097 = vpop.f32.mrf.mxu0
        %v2098 = vadd.f32 0.0, %v2097
        %v2099 = vpop.f32.mrf.mxu0
        %v2100 = vadd.f32 0.0, %v2099
        %2101 = vmatmul.bf16.gmra.mxu0 %v2080
        %v2102 = vpop.f32.mrf.mxu0
        %v2103 = vadd.f32 0.0, %v2102
        %v2104 = vpop.f32.mrf.mxu0
        %v2105 = vadd.f32 0.0, %v2104
        %2106 = vmatmul.bf16.gmra.mxu0 %v2083
        %v2107 = vpop.f32.mrf.mxu0
        %v2108 = vadd.f32 0.0, %v2107
        %v2109 = vpop.f32.mrf.mxu0
        %v2110 = vadd.f32 0.0, %v2109
        %2111 = vmatmul.bf16.gmra.mxu0 %v2086
        %v2112 = vpop.f32.mrf.mxu0
        %v2113 = vadd.f32 0.0, %v2112
        %v2114 = vpop.f32.mrf.mxu0
        %v2115 = vadd.f32 0.0, %v2114
        %2116 = vdwg.mxu0
        %v2117 = vld [vmem:[%s8] sm:$0x1]
        %v2119 = vperm.slane %v2117, 0
        %v2121 = vmul.f32 %v2098, %v2119
        %v2122 = vmul.f32 %v2100, %v2119
        %v2123 = vmul.f32 %v2103, %v2119
        %v2124 = vmul.f32 %v2105, %v2119
        %v2125 = vmul.f32 %v2108, %v2119
        %v2126 = vmul.f32 %v2110, %v2119
        %v2127 = vmul.f32 %v2113, %v2119
        %v2128 = vmul.f32 %v2115, %v2119
        %v2129 = vld [vmem:[%s9] sm:$0x1]
        %v2131 = vperm.slane %v2129, 0
        %v2133 = vadd.f32 %v2121, %v2131
        %v2134 = vadd.f32 %v2122, %v2131
        %v2135 = vadd.f32 %v2123, %v2131
        %v2136 = vadd.f32 %v2124, %v2131
        %v2137 = vadd.f32 %v2125, %v2131
        %v2138 = vadd.f32 %v2126, %v2131
        %v2139 = vadd.f32 %v2127, %v2131
        %v2140 = vadd.f32 %v2128, %v2131
        %v2141 = vmax.f32 %v2133, 0.0
        %v2142 = vmax.f32 %v2134, 0.0
        %v2143 = vmax.f32 %v2135, 0.0
        %v2144 = vmax.f32 %v2136, 0.0
        %v2145 = vmax.f32 %v2137, 0.0
        %v2146 = vmax.f32 %v2138, 0.0
        %v2147 = vmax.f32 %v2139, 0.0
        %v2148 = vmax.f32 %v2140, 0.0
        %v2149 = vld [vmem:[#allocation3] sm:$0x1]
        %v2150 = vld [vmem:[%s3] sm:$0xff]
        %v2151 = vld [vmem:[%s3 + $0x8] sm:$0xff]
        %v2152 = vld [vmem:[%s3 + $0x10] sm:$0xff]
        %v2153 = vld [vmem:[%s3 + $0x18] sm:$0xff]
        %v2154 = vld [vmem:[%s3 + $0x20] sm:$0xff]
        %v2155 = vld [vmem:[%s3 + $0x28] sm:$0xff]
        %v2156 = vld [vmem:[%s3 + $0x30] sm:$0xff]
        %v2157 = vld [vmem:[%s3 + $0x38] sm:$0xff]
        %2159 = vset.pattern.permute.xlu0 0
        %2160 = vperm.xlu0 %2159, %v2150
        %v2161 = vpop.permute.xlu0 %2160
        %2164 = vset.pattern.permute.xlu0 0
        %2165 = vperm.xlu0 %2164, %v2151
        %v2166 = vpop.permute.xlu0 %2165
        %2169 = vset.pattern.permute.xlu0 0
        %2170 = vperm.xlu0 %2169, %v2152
        %v2171 = vpop.permute.xlu0 %2170
        %2174 = vset.pattern.permute.xlu0 0
        %2175 = vperm.xlu0 %2174, %v2153
        %v2176 = vpop.permute.xlu0 %2175
        %2179 = vset.pattern.permute.xlu0 0
        %2180 = vperm.xlu0 %2179, %v2154
        %v2181 = vpop.permute.xlu0 %2180
        %2184 = vset.pattern.permute.xlu0 0
        %2185 = vperm.xlu0 %2184, %v2155
        %v2186 = vpop.permute.xlu0 %2185
        %2189 = vset.pattern.permute.xlu0 0
        %2190 = vperm.xlu0 %2189, %v2156
        %v2191 = vpop.permute.xlu0 %2190
        %2194 = vset.pattern.permute.xlu0 0
        %2195 = vperm.xlu0 %2194, %v2157
        %v2196 = vpop.permute.xlu0 %2195
        %v2198 = vmul.f32 %v2141, %v2161
        %v2199 = vmul.f32 %v2142, %v2166
        %v2200 = vmul.f32 %v2143, %v2171
        %v2201 = vmul.f32 %v2144, %v2176
        %v2202 = vmul.f32 %v2145, %v2181
        %v2203 = vmul.f32 %v2146, %v2186
        %v2204 = vmul.f32 %v2147, %v2191
        %v2205 = vmul.f32 %v2148, %v2196
        %v2206 = vadd.f32 %v2198, %v2199
        %v2207 = vadd.f32 %v2206, %v2200
        %v2208 = vadd.f32 %v2207, %v2201
        %v2209 = vadd.f32 %v2208, %v2202
        %v2210 = vadd.f32 %v2209, %v2203
        %v2211 = vadd.f32 %v2210, %v2204
        %v2212 = vadd.f32 %v2211, %v2205
        %v2213 = vrot.slane %v2212, 4
        %v2214 = vadd.f32 %v2212, %v2213
        %v2215 = vrot.slane %v2214, 2
        %v2216 = vadd.f32 %v2214, %v2215
        %v2217 = vrot.slane %v2216, 1
        %v2218 = vadd.f32 %v2216, %v2217
        %v2219 = vadd.f32 %v2149, %v2218
        %2220 = vst [vmem:[#allocation3] sm:$0x1] %v2219
        %p2221 = scmp.eq.s32.totalorder %s31, 3
        // Predicated region
        $region196: #{simple_recog_forward.1} parent=178 // pred_check
          %p2222 = pneg %p2221
        $region197: #{simple_recog_forward.1} parent=178 // pred_check_branch
          %2224 = sbr.rel (%p2222) target = $region199
        $region198: #{simple_recog_forward.1} parent=178 // pred_region
          %v2225 = vld [vmem:[#allocation3] sm:$0x1]
          %v2226 = vmul.f32 %v2225, 0.015625
          %v2227 = vld [vmem:[%s10] sm:$0xff]
          %v2228 = vld [vmem:[%s10 + $0x8] sm:$0xff]
          %v2229 = vld [vmem:[%s10 + $0x10] sm:$0xff]
          %v2230 = vld [vmem:[%s10 + $0x18] sm:$0xff]
          %v2231 = vld [vmem:[%s10 + $0x20] sm:$0xff]
          %v2232 = vld [vmem:[%s10 + $0x28] sm:$0xff]
          %v2233 = vld [vmem:[%s10 + $0x30] sm:$0xff]
          %v2234 = vld [vmem:[%s10 + $0x38] sm:$0xff]
          %v2235 = vld [vmem:[%s10 + $0x40] sm:$0xff]
          %v2236 = vld [vmem:[%s10 + $0x48] sm:$0xff]
          %v2237 = vld [vmem:[%s10 + $0x50] sm:$0xff]
          %v2238 = vld [vmem:[%s10 + $0x58] sm:$0xff]
          %v2239 = vld [vmem:[%s10 + $0x60] sm:$0xff]
          %v2240 = vld [vmem:[%s10 + $0x68] sm:$0xff]
          %v2241 = vld [vmem:[%s10 + $0x70] sm:$0xff]
          %v2242 = vld [vmem:[%s10 + $0x78] sm:$0xff]
          %v2243 = vld [vmem:[%s11] sm:$0x1]
          %2244 = vmatpush.msra.mxu0 %v2242
          %2245 = vmatpush.msra.mxu0 %v2241
          %2246 = vmatpush.msra.mxu0 %v2240
          %2247 = vmatpush.msra.mxu0 %v2239
          %2248 = vmatpush.msra.mxu0 %v2238
          %2249 = vmatpush.msra.mxu0 %v2237
          %2250 = vmatpush.msra.mxu0 %v2236
          %2251 = vmatpush.msra.mxu0 %v2235
          %2252 = vmatpush.msra.mxu0 %v2234
          %2253 = vmatpush.msra.mxu0 %v2233
          %2254 = vmatpush.msra.mxu0 %v2232
          %2255 = vmatpush.msra.mxu0 %v2231
          %2256 = vmatpush.msra.mxu0 %v2230
          %2257 = vmatpush.msra.mxu0 %v2229
          %2258 = vmatpush.msra.mxu0 %v2228
          %2259 = vmatpush.msra.mxu0 %v2227
          %2260 = vmatmul.f32.gmra.mxu0 %v2226
          %v2261 = vpop.f32.mrf.mxu0
          %v2262 = vadd.f32 %v2243, %v2261
          %2263 = vdwg.mxu0
          %2264 = vst [vmem:[%s864] sm:$0x1] %v2262
        $region199: #{simple_recog_forward.1} parent=178 // pred_fallthru
          _
        %s2265 = sand.u32 %s323, 1
        %s2266 = scalar_lea.sflag [#allocation8], %s2265
        %s2267 = sand.u32 %s323, 1
        %s2268 = scalar_lea.vmem [#allocation7], %s2267
        // Predicated region
        $region200: #{simple_recog_forward.1} parent=178 // pred_check
          %p2269 = pneg %p333
        $region201: #{simple_recog_forward.1} parent=178 // pred_check_branch
          %2271 = sbr.rel (%p2269) target = $region203
        $region202: #{simple_recog_forward.1} parent=178 // pred_region
          %2273 = vsyncadd %s2266, 0
          %s2274 = scalar_lea.hbm %s12, %s30
          %s2276 = sshll.u32 %s2268, 4
          %s2277 = int_to_ptr.vmem [resolvable:$true] %s2276
          %s2278 = sshll.u32 %s2274, 4
          %s2279 = int_to_ptr.hbm [resolvable:$true] %s2278
          %2281 = dma.vmem_to_hbm [thread:$0]  %s2277, 16, %s2279, %s2266
        $region203: #{simple_recog_forward.1} parent=178 // pred_fallthru
          _
      $region179: #{simple_recog_forward.1} parent=5 // pred_fallthru
        _
      %p2282 = scmp.le.s32.totalorder 2, %s21
      // Predicated region
      $region204: #{simple_recog_forward.1} parent=5 // pred_check
        %p2283 = pneg %p2282
      $region205: #{simple_recog_forward.1} parent=5 // pred_check_branch
        %2285 = sbr.rel (%p2283) target = $region207
      $region206: #{simple_recog_forward.1} parent=5 // pred_region
        %s2286 = ssub.s32 %s21, 2
        // Predicated region
        $region208: #{simple_recog_forward.1} parent=206 // pred_check
          %p2287 = pneg %p339
        $region209: #{simple_recog_forward.1} parent=206 // pred_check_branch
          %2289 = sbr.rel (%p2287) target = $region211
        $region210: #{simple_recog_forward.1} parent=206 // pred_region
          %s2290 = sand.u32 %s324, 1
          %s2291 = scalar_lea.sflag [#allocation8], %s2290
          %s2292 = sand.u32 %s324, 1
          %s2293 = scalar_lea.vmem [#allocation7], %s2292
          %2295 = dma.done %s2291, 16
        $region211: #{simple_recog_forward.1} parent=206 // pred_fallthru
          _
      $region207: #{simple_recog_forward.1} parent=5 // pred_fallthru
        _
    $region6: #{simple_recog_forward.1} parent=1 // loop_footer
      %s25 = sadd.s32 1, %s21
    $region7: #{simple_recog_forward.1} parent=1 // loop_footer_branch
      %20 = sbr.rel target = $region3
    $region8: #{simple_recog_forward.1} parent=1 // loop_exit
      _
    %2296 = vsyncpa [#allocation8], 1
    %s2297 = scalar_lea.sflag [#allocation8], 1
    %2298 = vsyncpa %s2297, 1

</llo_original>
